<compile_context>
chip_gen: v7x
topology: tpu7x:2x2x1
jax: 0.10.0
libtpu: 0.0.40
codegen_flags: <defaults>
</compile_context>

<pallas_src>
import jax
import jax.numpy as jnp
from jax.experimental import pallas as pl
from jax.experimental.pallas import tpu as pltpu


def moe_kernel(x_ref, w1_ref, b1_ref, w2_ref, b2_ref, wg_ref, bg_ref, yg_ref,
               res_ref, a_ref):
    """Fused MoE forward for one batch tile (eval-mode dropout/BN).

    x_ref  : [TB, D_in]   input tile
    w1_ref : [D_in, H]    encoder Linear weight (pre-transposed)
    b1_ref : [1, H]       encoder Linear bias
    w2_ref : [H, D_pad]   head Linear weight with BatchNorm folded in, padded to 128-lane width
    b2_ref : [1, D_pad]   folded bias (-1e30 in padded columns -> exp() == 0, softmax unaffected)
    wg_ref : [1, D_in]    gate Linear weight (row vector; gate is D_in -> 1)
    bg_ref : [1, 1]       gate bias
    yg_ref : [TB, D_pad]  global-expert output, zero-padded to D_pad
    res_ref: [TB, D_pad]  mixed output (padded columns are sliced off in the wrapper)
    a_ref  : [TB, 1]      gate value
    """
    x = x_ref[...]

    # Encoder: (dropout = id) -> Linear -> ReLU. BatchNorm is folded into w2/b2.
    h = jnp.dot(x, w1_ref[...], preferred_element_type=jnp.float32) + b1_ref[...]
    h = jnp.maximum(h, 0.0)

    # Classifier head: (dropout = id) -> Linear(+BN fold) -> log_softmax (stable, f32)
    logits = jnp.dot(h, w2_ref[...], preferred_element_type=jnp.float32) + b2_ref[...]
    m = jnp.max(logits, axis=-1, keepdims=True)
    shifted = logits - m
    lse = jnp.log(jnp.sum(jnp.exp(shifted), axis=-1, keepdims=True))
    yl = shifted - lse

    # Gate: sigmoid(x @ wg + bg); N=1, so keep it off the MXU (VPU mul + lane reduce).
    g = jnp.sum(x * wg_ref[...], axis=-1, keepdims=True) + bg_ref[...]
    a = 1.0 / (1.0 + jnp.exp(-g))

    res_ref[...] = (yl * a + yg_ref[...] * (1.0 - a)).astype(res_ref.dtype)
    a_ref[...] = a.astype(a_ref.dtype)


def moe_forward(x, yg, params, *, tb_max=512):
    """x: [B, D_in] f32, yg: [B, D_out] f32. Returns (res [B, D_out], a [B, 1])."""
    B, d_in = x.shape
    H = params["w1"].shape[1]
    d_out = params["w2"].shape[1]

    # ---- Fold BatchNorm (running stats) into the second Linear ----
    s = params["gamma"] * jax.lax.rsqrt(params["var"] + 1e-5)                 # [1, H]
    w2f = params["w2"] * s.reshape(H, 1)                                      # [H, D_out]
    b2f = params["b2"] + (params["beta"] - params["mean"] * s) @ params["w2"] # [1, D_out]

    # ---- Lane-dense output: pad D_out up to a multiple of 128 ----
    d_pad = ((d_out + 127) // 128) * 128
    if d_pad != d_out:
        pad = d_pad - d_out
        w2f = jnp.pad(w2f, ((0, 0), (0, pad)))
        b2f = jnp.pad(b2f, ((0, 0), (0, pad)), constant_values=-1e30)
        yg_p = jnp.pad(yg, ((0, 0), (0, pad)))
    else:
        yg_p = yg

    # ---- Batch tiling: grid over batch, weights stay VMEM-resident across steps ----
    tb = tb_max if B >= tb_max else max(8, ((B + 7) // 8) * 8)
    b_pad = pl.cdiv(B, tb) * tb
    if b_pad != B:
        x_p = jnp.pad(x, ((0, b_pad - B), (0, 0)))
        yg_p = jnp.pad(yg_p, ((0, b_pad - B), (0, 0)))
    else:
        x_p = x

    wg_row = params["wg"].reshape(1, d_in)
    bg = params["bg"].reshape(1, 1)

    def batch_spec(cols):
        return pl.BlockSpec((tb, cols), lambda i: (i, 0))

    def resident(shape):
        return pl.BlockSpec(shape, lambda i: (0, 0))

    flops = 2 * b_pad * (d_in * H + H * d_pad + d_in)
    transcendentals = b_pad * (d_pad + 2)  # softmax exps + log + gate exp
    bytes_accessed = 4 * (b_pad * d_in + d_in * H + H + H * d_pad + d_pad
                          + d_in + 1 + 2 * b_pad * d_pad + b_pad * d_pad + b_pad)

    res_p, a_p = pl.pallas_call(
        moe_kernel,
        out_shape=(jax.ShapeDtypeStruct((b_pad, d_pad), jnp.float32),
                   jax.ShapeDtypeStruct((b_pad, 1), jnp.float32)),
        grid=(b_pad // tb,),
        in_specs=[
            batch_spec(d_in),          # x tile
            resident((d_in, H)),       # w1
            resident((1, H)),          # b1
            resident((H, d_pad)),      # w2 (BN folded, lane-padded)
            resident((1, d_pad)),      # b2 (folded, -1e30 in padded lanes)
            resident((1, d_in)),       # gate weight row
            resident((1, 1)),          # gate bias
            batch_spec(d_pad),         # yg tile
        ],
        out_specs=(batch_spec(d_pad),                        # res tile
                   pl.BlockSpec((tb, 1), lambda i: (i, 0))), # gate value
        compiler_params=pltpu.CompilerParams(
            dimension_semantics=("parallel",)),
        cost_estimate=pl.CostEstimate(
            flops=flops, transcendentals=transcendentals,
            bytes_accessed=bytes_accessed),
    )(x_p, params["w1"], params["b1"], w2f, b2f, wg_row, bg, yg_p)

    return res_p[:B, :d_out], a_p[:B]


def init_params(key, dim_in, dim_hidden, dim_out):
    """Deterministic synthetic parameters, PyTorch-compatible shapes (then transposed)."""
    ks = jax.random.split(key, 10)
    # nn.Linear(dim_in, dim_hidden): weight [H, D_in], bias [H]  -> stored transposed [D_in, H]
    w1 = jax.random.normal(ks[0], (dim_hidden, dim_in), jnp.float32) * 0.1
    b1 = jax.random.normal(ks[1], (dim_hidden,), jnp.float32) * 0.1
    # nn.Linear(dim_hidden, dim_out)
    w2 = jax.random.normal(ks[2], (dim_out, dim_hidden), jnp.float32) * 0.1
    b2 = jax.random.normal(ks[3], (dim_out,), jnp.float32) * 0.1
    # BatchNorm1d(dim_hidden): use non-trivial affine + running stats to exercise the fold
    gamma = 1.0 + 0.1 * jax.random.normal(ks[4], (dim_hidden,), jnp.float32)
    beta = 0.1 * jax.random.normal(ks[5], (dim_hidden,), jnp.float32)
    running_mean = jax.random.normal(ks[6], (dim_hidden,), jnp.float32) * 0.05
    running_var = jnp.abs(jax.random.normal(ks[7], (dim_hidden,), jnp.float32)) * 0.1 + 1.0
    # gate: nn.Linear(dim_in, 1)
    wg = jax.random.normal(ks[8], (1, dim_in), jnp.float32) * 0.1
    bg = jax.random.normal(ks[9], (1,), jnp.float32) * 0.1
    return {
        "w1": jnp.asarray(w1.T),                  # [D_in, H]
        "b1": b1.reshape(1, dim_hidden),          # [1, H]
        "gamma": gamma.reshape(1, dim_hidden),
        "beta": beta.reshape(1, dim_hidden),
        "mean": running_mean.reshape(1, dim_hidden),
        "var": running_var.reshape(1, dim_hidden),
        "w2": jnp.asarray(w2.T),                  # [H, D_out]
        "b2": b2.reshape(1, dim_out),             # [1, D_out]
        "wg": jnp.asarray(wg.T),                  # [D_in, 1]
        "bg": bg.reshape(1, 1),                   # [1, 1]
    }


def reference_forward(x, yg, p):
    """Pure-JAX reference (unfolded BN) for correctness checking."""
    h = x @ p["w1"] + p["b1"]
    h = jnp.maximum(h, 0.0)
    h = (h - p["mean"]) * jax.lax.rsqrt(p["var"] + 1e-5) * p["gamma"] + p["beta"]
    logits = h @ p["w2"] + p["b2"]
    yl = jax.nn.log_softmax(logits, axis=-1)
    a = jax.nn.sigmoid(x @ p["wg"] + p["bg"])
    res = yl * a + yg * (1.0 - a)
    return res, a


if __name__ == "__main__":
    # Small shapes; B is deliberately not a multiple of the tile to exercise batch padding,
    # and tb_max=128 gives a 2-step grid so pipelining / resident-weight index maps are tested.
    B, DIM_IN, DIM_HIDDEN, DIM_OUT = 250, 32, 64, 16
    key = jax.random.PRNGKey(0)
    kx, kg, kp = jax.random.split(key, 3)
    x = jax.random.normal(kx, (B, DIM_IN), jnp.float32)
    # "global expert" prediction: log-probabilities over DIM_OUT classes
    yg = jax.nn.log_softmax(jax.random.normal(kg, (B, DIM_OUT), jnp.float32), axis=-1)
    params = init_params(kp, DIM_IN, DIM_HIDDEN, DIM_OUT)

    res, a = moe_forward(x, yg, params, tb_max=128)
    res, a = jax.block_until_ready((res, a))

    res_ref, a_ref = reference_forward(x, yg, params)
    assert res.shape == (B, DIM_OUT) and a.shape == (B, 1)
    assert jnp.all(jnp.isfinite(res)) and jnp.all(jnp.isfinite(a))
    assert jnp.allclose(a, a_ref, atol=1e-5, rtol=1e-5), "gate mismatch vs reference"
    assert jnp.allclose(res, res_ref, atol=1e-4, rtol=1e-4), "output mismatch vs reference"

    print("KERNEL_OK")
</pallas_src>

<mosaic_0001>
module attributes {stable_mosaic.version = 11 : i64} {
  func.func @moe_kernel(%arg0: i32, %arg1: memref<128x32xf32, #tpu.memory_space<vmem>>, %arg2: memref<32x64xf32, #tpu.memory_space<vmem>>, %arg3: memref<1x64xf32, #tpu.memory_space<vmem>>, %arg4: memref<64x128xf32, #tpu.memory_space<vmem>>, %arg5: memref<1x128xf32, #tpu.memory_space<vmem>>, %arg6: memref<1x32xf32, #tpu.memory_space<vmem>>, %arg7: memref<1x1xf32, #tpu.memory_space<vmem>>, %arg8: memref<128x128xf32, #tpu.memory_space<vmem>>, %arg9: memref<128x128xf32, #tpu.memory_space<vmem>>, %arg10: memref<128x1xf32, #tpu.memory_space<vmem>>) attributes {dimension_semantics = [#tpu.dimension_semantics<parallel>], iteration_bounds = array<i64: 2>, scalar_prefetch = 0 : i64, scratch_operands = 0 : i64, tpu.core_type = #tpu.core_type<tc>, window_params = [{transform_indices = @transform_0, window_bounds = array<i64: 128, 32>}, {pipeline_mode = #tpu.pipeline_mode<synchronous>, transform_indices = @transform_1, window_bounds = array<i64: 32, 64>}, {pipeline_mode = #tpu.pipeline_mode<synchronous>, transform_indices = @transform_2, window_bounds = array<i64: 1, 64>}, {pipeline_mode = #tpu.pipeline_mode<synchronous>, transform_indices = @transform_3, window_bounds = array<i64: 64, 128>}, {pipeline_mode = #tpu.pipeline_mode<synchronous>, transform_indices = @transform_4, window_bounds = array<i64: 1, 128>}, {pipeline_mode = #tpu.pipeline_mode<synchronous>, transform_indices = @transform_5, window_bounds = array<i64: 1, 32>}, {pipeline_mode = #tpu.pipeline_mode<synchronous>, transform_indices = @transform_6, window_bounds = array<i64: 1, 1>}, {transform_indices = @transform_7, window_bounds = array<i64: 128, 128>}, {transform_indices = @transform_8, window_bounds = array<i64: 128, 128>}, {transform_indices = @transform_9, window_bounds = array<i64: 128, 1>}]} {
    %c0 = arith.constant 0 : index
    %c0_0 = arith.constant 0 : index
    %0 = vector.load %arg1[%c0, %c0_0] : memref<128x32xf32, #tpu.memory_space<vmem>>, vector<128x32xf32>
    %c0_1 = arith.constant 0 : index
    %c0_2 = arith.constant 0 : index
    %1 = vector.load %arg2[%c0_1, %c0_2] : memref<32x64xf32, #tpu.memory_space<vmem>>, vector<32x64xf32>
    %cst = arith.constant dense<0.000000e+00> : vector<128x64xf32>
    %2 = tpu.matmul %0, %1, %cst {dimension_numbers = #tpu.dot_dimension_numbers<[1], [0], [0], [1], [0, 0, 1, 1], [], []>} : vector<128x32xf32>, vector<32x64xf32>, vector<128x64xf32> -> vector<128x64xf32>
    %c0_3 = arith.constant 0 : index
    %c0_4 = arith.constant 0 : index
    %3 = vector.load %arg3[%c0_3, %c0_4] : memref<1x64xf32, #tpu.memory_space<vmem>>, vector<1x64xf32>
    %4 = vector.broadcast %3 : vector<1x64xf32> to vector<128x64xf32>
    %5 = arith.addf %2, %4 : vector<128x64xf32>
    %cst_5 = arith.constant 0.000000e+00 : f32
    %6 = vector.broadcast %cst_5 : f32 to vector<128x64xf32>
    %7 = arith.maximumf %5, %6 : vector<128x64xf32>
    %c0_6 = arith.constant 0 : index
    %c0_7 = arith.constant 0 : index
    %8 = vector.load %arg4[%c0_6, %c0_7] : memref<64x128xf32, #tpu.memory_space<vmem>>, vector<64x128xf32>
    %cst_8 = arith.constant dense<0.000000e+00> : vector<128x128xf32>
    %9 = tpu.matmul %7, %8, %cst_8 {dimension_numbers = #tpu.dot_dimension_numbers<[1], [0], [0], [1], [0, 0, 1, 1], [], []>} : vector<128x64xf32>, vector<64x128xf32>, vector<128x128xf32> -> vector<128x128xf32>
    %c0_9 = arith.constant 0 : index
    %c0_10 = arith.constant 0 : index
    %10 = vector.load %arg5[%c0_9, %c0_10] : memref<1x128xf32, #tpu.memory_space<vmem>>, vector<1x128xf32>
    %11 = vector.broadcast %10 : vector<1x128xf32> to vector<128x128xf32>
    %12 = arith.addf %9, %11 : vector<128x128xf32>
    %cst_11 = arith.constant dense<0xFF800000> : vector<128xf32>
    %13 = vector.multi_reduction <maximumf>, %12, %cst_11 [1] : vector<128x128xf32> to vector<128xf32>
    %14 = vector.shape_cast %13 : vector<128xf32> to vector<128x1xf32>
    %15 = vector.broadcast %14 : vector<128x1xf32> to vector<128x128xf32>
    %16 = arith.subf %12, %15 : vector<128x128xf32>
    %17 = math.exp %16 : vector<128x128xf32>
    %cst_12 = arith.constant dense<0.000000e+00> : vector<128xf32>
    %18 = vector.multi_reduction <add>, %17, %cst_12 [1] : vector<128x128xf32> to vector<128xf32>
    %19 = vector.shape_cast %18 : vector<128xf32> to vector<128x1xf32>
    %20 = math.log %19 : vector<128x1xf32>
    %21 = vector.broadcast %20 : vector<128x1xf32> to vector<128x128xf32>
    %22 = arith.subf %16, %21 : vector<128x128xf32>
    %c0_13 = arith.constant 0 : index
    %c0_14 = arith.constant 0 : index
    %23 = vector.load %arg6[%c0_13, %c0_14] : memref<1x32xf32, #tpu.memory_space<vmem>>, vector<1x32xf32>
    %24 = vector.broadcast %23 : vector<1x32xf32> to vector<128x32xf32>
    %25 = arith.mulf %0, %24 : vector<128x32xf32>
    %cst_15 = arith.constant dense<0.000000e+00> : vector<128xf32>
    %26 = vector.multi_reduction <add>, %25, %cst_15 [1] : vector<128x32xf32> to vector<128xf32>
    %27 = vector.shape_cast %26 : vector<128xf32> to vector<128x1xf32>
    %c0_16 = arith.constant 0 : index
    %c0_17 = arith.constant 0 : index
    %28 = vector.load %arg7[%c0_16, %c0_17] : memref<1x1xf32, #tpu.memory_space<vmem>>, vector<1x1xf32>
    %29 = vector.broadcast %28 : vector<1x1xf32> to vector<128x1xf32>
    %30 = arith.addf %27, %29 : vector<128x1xf32>
    %cst_18 = arith.constant 0.000000e+00 : f32
    %31 = vector.broadcast %cst_18 : f32 to vector<128x1xf32>
    %32 = arith.subf %31, %30 : vector<128x1xf32>
    %33 = math.exp %32 : vector<128x1xf32>
    %cst_19 = arith.constant 1.000000e+00 : f32
    %34 = vector.broadcast %cst_19 : f32 to vector<128x1xf32>
    %35 = arith.addf %34, %33 : vector<128x1xf32>
    %cst_20 = arith.constant 1.000000e+00 : f32
    %36 = vector.broadcast %cst_20 : f32 to vector<128x1xf32>
    %37 = arith.divf %36, %35 : vector<128x1xf32>
    %38 = vector.broadcast %37 : vector<128x1xf32> to vector<128x128xf32>
    %39 = arith.mulf %22, %38 : vector<128x128xf32>
    %c0_21 = arith.constant 0 : index
    %c0_22 = arith.constant 0 : index
    %40 = vector.load %arg8[%c0_21, %c0_22] : memref<128x128xf32, #tpu.memory_space<vmem>>, vector<128x128xf32>
    %cst_23 = arith.constant 1.000000e+00 : f32
    %41 = vector.broadcast %cst_23 : f32 to vector<128x1xf32>
    %42 = arith.subf %41, %37 : vector<128x1xf32>
    %43 = vector.broadcast %42 : vector<128x1xf32> to vector<128x128xf32>
    %44 = arith.mulf %40, %43 : vector<128x128xf32>
    %45 = arith.addf %39, %44 : vector<128x128xf32>
    %c0_24 = arith.constant 0 : index
    %c0_25 = arith.constant 0 : index
    %46 = vector.load %arg9[%c0_24, %c0_25] : memref<128x128xf32, #tpu.memory_space<vmem>>, vector<128x128xf32>
    tpu.vector_store %arg9[%c0_24, %c0_25], %45 {strides = array<i32>} : memref<128x128xf32, #tpu.memory_space<vmem>>, vector<128x128xf32>,
    %c0_26 = arith.constant 0 : index
    %c0_27 = arith.constant 0 : index
    %47 = vector.load %arg10[%c0_26, %c0_27] : memref<128x1xf32, #tpu.memory_space<vmem>>, vector<128x1xf32>
    tpu.vector_store %arg10[%c0_26, %c0_27], %37 {strides = array<i32>} : memref<128x1xf32, #tpu.memory_space<vmem>>, vector<128x1xf32>,
    return
  }
  func.func @transform_0(%arg0: i32) -> (i32, i32) {
    %c0_i32 = arith.constant 0 : i32
    %c0_i32_0 = arith.constant 0 : i32
    return %arg0, %c0_i32 : i32, i32
  }
  func.func @transform_1(%arg0: i32) -> (i32, i32) {
    %c0_i32 = arith.constant 0 : i32
    %c0_i32_0 = arith.constant 0 : i32
    %c0_i32_1 = arith.constant 0 : i32
    return %c0_i32, %c0_i32_0 : i32, i32
  }
  func.func @transform_2(%arg0: i32) -> (i32, i32) {
    %c0_i32 = arith.constant 0 : i32
    %c0_i32_0 = arith.constant 0 : i32
    %c0_i32_1 = arith.constant 0 : i32
    return %c0_i32, %c0_i32_0 : i32, i32
  }
  func.func @transform_3(%arg0: i32) -> (i32, i32) {
    %c0_i32 = arith.constant 0 : i32
    %c0_i32_0 = arith.constant 0 : i32
    %c0_i32_1 = arith.constant 0 : i32
    return %c0_i32, %c0_i32_0 : i32, i32
  }
  func.func @transform_4(%arg0: i32) -> (i32, i32) {
    %c0_i32 = arith.constant 0 : i32
    %c0_i32_0 = arith.constant 0 : i32
    %c0_i32_1 = arith.constant 0 : i32
    return %c0_i32, %c0_i32_0 : i32, i32
  }
  func.func @transform_5(%arg0: i32) -> (i32, i32) {
    %c0_i32 = arith.constant 0 : i32
    %c0_i32_0 = arith.constant 0 : i32
    %c0_i32_1 = arith.constant 0 : i32
    return %c0_i32, %c0_i32_0 : i32, i32
  }
  func.func @transform_6(%arg0: i32) -> (i32, i32) {
    %c0_i32 = arith.constant 0 : i32
    %c0_i32_0 = arith.constant 0 : i32
    %c0_i32_1 = arith.constant 0 : i32
    return %c0_i32, %c0_i32_0 : i32, i32
  }
  func.func @transform_7(%arg0: i32) -> (i32, i32) {
    %c0_i32 = arith.constant 0 : i32
    %c0_i32_0 = arith.constant 0 : i32
    return %arg0, %c0_i32 : i32, i32
  }
  func.func @transform_8(%arg0: i32) -> (i32, i32) {
    %c0_i32 = arith.constant 0 : i32
    %c0_i32_0 = arith.constant 0 : i32
    return %arg0, %c0_i32 : i32, i32
  }
  func.func @transform_9(%arg0: i32) -> (i32, i32) {
    %c0_i32 = arith.constant 0 : i32
    %c0_i32_0 = arith.constant 0 : i32
    return %arg0, %c0_i32 : i32, i32
  }
}

</mosaic_0001>

<llo_original>
// kernel: tpu_custom_call.1
$region0: #{tpu_custom_call.1}
  #allocation0 [shape = 'u32[]', space=smem, size = 0x4, offset = 0x4, fixed_abs, tag = 'smem constant byte address 0x4 - core index']
  #allocation1 [shape = 'u32[144,128]{1,0:T(1,128)}', space=vmem, size = 0x12000, scoped, tag = 'internal scratch']
  #allocation2 [shape = 'f32[1,1]{1,0:T(1,128)S(1)}', space=vmem, size = 0x200, scoped, tag = 'scoped memory for tpu_custom_call.1']
  %s0 = inlined_call_operand.vmem [shape: f32[256,32], index: 0, kind: input, shape index: {}]
  %s1 = inlined_call_operand.hbm [shape: f32[32,64], index: 1, kind: input, shape index: {}]
  %s2 = inlined_call_operand.vmem [shape: f32[1,64], index: 2, kind: input, shape index: {}]
  %s3 = inlined_call_operand.vmem [shape: f32[64,128], index: 3, kind: input, shape index: {}]
  %s4 = inlined_call_operand.vmem [shape: f32[1,128], index: 4, kind: input, shape index: {}]
  %s5 = inlined_call_operand.vmem [shape: f32[1,32], index: 5, kind: input, shape index: {}]
  %s6 = inlined_call_operand.<no memory space> [shape: f32[1,1], index: 6, kind: input, shape index: {}]
  %s7 = inlined_call_operand.vmem [shape: f32[256,128], index: 7, kind: input, shape index: {}]
  %s8 = inlined_call_operand.hbm [shape: f32[256,128], index: 8, kind: output, shape index: {0}]
  %s9 = inlined_call_operand.vmem [shape: f32[256,1], index: 9, kind: output, shape index: {1}]
  %10 = xla_tuple %s8, %s9
  %s11 = sld [smem:[#allocation0]]
  $region77: #{tpu_custom_call.1} parent=0
    _
  %s13 = ssub.s32 1, %s11
  %s14 = scalar_select 0, %s13, %s11
  %v15 = vstv %s6
  %16 = vst [vmem:[#allocation2] sm:$0x1] %v15
  $region1: #{tpu_custom_call.1} parent=0
    #allocation3 [shape = 'u8[16384]{0}', space=vmem, size = 0x4000, scoped, tag = 'input window, operand 1, single buffered']
    #allocation4 [shape = 's32[2]{0}', space=sflag, size = 0x8, scoped, tag = 'scoped memory for tpu_custom_call.1']
    #allocation5 [shape = 's32[2]{0}', space=sflag, size = 0x8, scoped, tag = 'scoped memory for tpu_custom_call.1']
    #allocation6 [shape = 'u8[131072]{0}', space=vmem, size = 0x20000, scoped, tag = 'output window, operand 0']
    %17 = vsyncpa [#allocation4], 0
    %18 = vsyncpa [#allocation5], 0
    %s19 = scalar_lea.sflag [#allocation5], 1
    %20 = vsyncpa %s19, 0
    loop: start=0, step=1, limit=4
    $region2: #{tpu_custom_call.1} parent=1 // loop_pre_header
      _
    $region3: #{tpu_custom_call.1} parent=1 // loop_header
      %s22 = sphi 0, %s26
      %p23 = scmp.ge.s32.totalorder %s22, 4
      %s32 = sphi 0, %s34
      %s35 = sphi 0, %s32
      %s36 = sphi 0, %s35
      %s52 = sphi 0, %s36
      %s56 = sphi 0, %s56
      %s58 = sphi 0, %s56
      %s59 = sphi 0, %s58
      %s73 = sphi 0, %s59
      %s77 = sphi 0, %s77
      %s79 = sphi 0, %s77
      %s80 = sphi 0, %s79
      %s94 = sphi 0, %s80
      %s98 = sphi 0, %s98
      %s100 = sphi 0, %s98
      %s101 = sphi 0, %s100
      %s115 = sphi 0, %s101
      %s119 = sphi 0, %s119
      %s121 = sphi 0, %s119
      %s122 = sphi 0, %s121
      %s136 = sphi 0, %s122
      %s140 = sphi 0, %s140
      %s142 = sphi 0, %s140
      %s143 = sphi 0, %s142
      %s157 = sphi 0, %s143
      %s161 = sphi 0, %s161
      %s163 = sphi 0, %s161
      %s164 = sphi 0, %s163
      %s178 = sphi 0, %s164
      %s184 = sphi 0, %s186
      %s187 = sphi 0, %s184
      %s188 = sphi 0, %s187
      %s204 = sphi 0, %s188
      %s210 = sphi 0, %s212
      %s213 = sphi 0, %s210
      %s214 = sphi 0, %s213
      %s230 = sphi 0, %s214
      %s236 = sphi 0, %s238
      %s239 = sphi 0, %s236
      %s240 = sphi 0, %s239
      %s256 = sphi 0, %s240
    $region4: #{tpu_custom_call.1} parent=1 // loop_header_branch
      %25 = sbr.rel (%p23) target = $region8
    $region5: #{tpu_custom_call.1} parent=1 // loop_body
      %s27 = ssub.s32 %s22, 1
      %s28 = ssub.s32 %s22, 2
      %s29 = sadd.s32 %s22, 1
      %s30 = ssub.s32 %s22, %s29
      %p31 = scmp.eq.s32.totalorder %s30, 0
      %s33 = sadd.s32 %s32, 1
      %s34 = scalar_select %p31, %s32, %s33
      %p37 = pneg %p31
      %p38 = scmp.eq.s32.totalorder %s22, 1
      %p39 = por %p37, %p38
      %p40 = scmp.ne.s32.totalorder %s32, %s35
      %p41 = scmp.eq.s32.totalorder %s22, 0
      %p42 = por %p40, %p41
      %p43 = scmp.ne.s32.totalorder %s32, %s35
      %p44 = scmp.eq.s32.totalorder %s27, 1
      %p45 = por %p43, %p44
      %p46 = scmp.ne.s32.totalorder %s35, %s36
      %p47 = scmp.eq.s32.totalorder %s27, 0
      %p48 = por %p46, %p47
      %p49 = scmp.ne.s32.totalorder %s35, %s36
      %p50 = scmp.eq.s32.totalorder %s28, 1
      %p51 = por %p49, %p50
      %p53 = scmp.ne.s32.totalorder %s36, %s52
      %p54 = scmp.eq.s32.totalorder %s28, 0
      %p55 = por %p53, %p54
      %s57 = sadd.s32 %s56, 1
      %p60 = scmp.eq.s32.totalorder %s22, 1
      %p61 = scmp.ne.s32.totalorder %s56, %s58
      %p62 = scmp.eq.s32.totalorder %s22, 0
      %p63 = por %p61, %p62
      %p64 = scmp.ne.s32.totalorder %s56, %s58
      %p65 = scmp.eq.s32.totalorder %s27, 1
      %p66 = por %p64, %p65
      %p67 = scmp.ne.s32.totalorder %s58, %s59
      %p68 = scmp.eq.s32.totalorder %s27, 0
      %p69 = por %p67, %p68
      %p70 = scmp.ne.s32.totalorder %s58, %s59
      %p71 = scmp.eq.s32.totalorder %s28, 1
      %p72 = por %p70, %p71
      %p74 = scmp.ne.s32.totalorder %s59, %s73
      %p75 = scmp.eq.s32.totalorder %s28, 0
      %p76 = por %p74, %p75
      %s78 = sadd.s32 %s77, 1
      %p81 = scmp.eq.s32.totalorder %s22, 1
      %p82 = scmp.ne.s32.totalorder %s77, %s79
      %p83 = scmp.eq.s32.totalorder %s22, 0
      %p84 = por %p82, %p83
      %p85 = scmp.ne.s32.totalorder %s77, %s79
      %p86 = scmp.eq.s32.totalorder %s27, 1
      %p87 = por %p85, %p86
      %p88 = scmp.ne.s32.totalorder %s79, %s80
      %p89 = scmp.eq.s32.totalorder %s27, 0
      %p90 = por %p88, %p89
      %p91 = scmp.ne.s32.totalorder %s79, %s80
      %p92 = scmp.eq.s32.totalorder %s28, 1
      %p93 = por %p91, %p92
      %p95 = scmp.ne.s32.totalorder %s80, %s94
      %p96 = scmp.eq.s32.totalorder %s28, 0
      %p97 = por %p95, %p96
      %s99 = sadd.s32 %s98, 1
      %p102 = scmp.eq.s32.totalorder %s22, 1
      %p103 = scmp.ne.s32.totalorder %s98, %s100
      %p104 = scmp.eq.s32.totalorder %s22, 0
      %p105 = por %p103, %p104
      %p106 = scmp.ne.s32.totalorder %s98, %s100
      %p107 = scmp.eq.s32.totalorder %s27, 1
      %p108 = por %p106, %p107
      %p109 = scmp.ne.s32.totalorder %s100, %s101
      %p110 = scmp.eq.s32.totalorder %s27, 0
      %p111 = por %p109, %p110
      %p112 = scmp.ne.s32.totalorder %s100, %s101
      %p113 = scmp.eq.s32.totalorder %s28, 1
      %p114 = por %p112, %p113
      %p116 = scmp.ne.s32.totalorder %s101, %s115
      %p117 = scmp.eq.s32.totalorder %s28, 0
      %p118 = por %p116, %p117
      %s120 = sadd.s32 %s119, 1
      %p123 = scmp.eq.s32.totalorder %s22, 1
      %p124 = scmp.ne.s32.totalorder %s119, %s121
      %p125 = scmp.eq.s32.totalorder %s22, 0
      %p126 = por %p124, %p125
      %p127 = scmp.ne.s32.totalorder %s119, %s121
      %p128 = scmp.eq.s32.totalorder %s27, 1
      %p129 = por %p127, %p128
      %p130 = scmp.ne.s32.totalorder %s121, %s122
      %p131 = scmp.eq.s32.totalorder %s27, 0
      %p132 = por %p130, %p131
      %p133 = scmp.ne.s32.totalorder %s121, %s122
      %p134 = scmp.eq.s32.totalorder %s28, 1
      %p135 = por %p133, %p134
      %p137 = scmp.ne.s32.totalorder %s122, %s136
      %p138 = scmp.eq.s32.totalorder %s28, 0
      %p139 = por %p137, %p138
      %s141 = sadd.s32 %s140, 1
      %p144 = scmp.eq.s32.totalorder %s22, 1
      %p145 = scmp.ne.s32.totalorder %s140, %s142
      %p146 = scmp.eq.s32.totalorder %s22, 0
      %p147 = por %p145, %p146
      %p148 = scmp.ne.s32.totalorder %s140, %s142
      %p149 = scmp.eq.s32.totalorder %s27, 1
      %p150 = por %p148, %p149
      %p151 = scmp.ne.s32.totalorder %s142, %s143
      %p152 = scmp.eq.s32.totalorder %s27, 0
      %p153 = por %p151, %p152
      %p154 = scmp.ne.s32.totalorder %s142, %s143
      %p155 = scmp.eq.s32.totalorder %s28, 1
      %p156 = por %p154, %p155
      %p158 = scmp.ne.s32.totalorder %s143, %s157
      %p159 = scmp.eq.s32.totalorder %s28, 0
      %p160 = por %p158, %p159
      %s162 = sadd.s32 %s161, 1
      %p165 = scmp.eq.s32.totalorder %s22, 1
      %p166 = scmp.ne.s32.totalorder %s161, %s163
      %p167 = scmp.eq.s32.totalorder %s22, 0
      %p168 = por %p166, %p167
      %p169 = scmp.ne.s32.totalorder %s161, %s163
      %p170 = scmp.eq.s32.totalorder %s27, 1
      %p171 = por %p169, %p170
      %p172 = scmp.ne.s32.totalorder %s163, %s164
      %p173 = scmp.eq.s32.totalorder %s27, 0
      %p174 = por %p172, %p173
      %p175 = scmp.ne.s32.totalorder %s163, %s164
      %p176 = scmp.eq.s32.totalorder %s28, 1
      %p177 = por %p175, %p176
      %p179 = scmp.ne.s32.totalorder %s164, %s178
      %p180 = scmp.eq.s32.totalorder %s28, 0
      %p181 = por %p179, %p180
      %s182 = ssub.s32 %s22, %s29
      %p183 = scmp.eq.s32.totalorder %s182, 0
      %s185 = sadd.s32 %s184, 1
      %s186 = scalar_select %p183, %s184, %s185
      %p189 = pneg %p183
      %p190 = scmp.eq.s32.totalorder %s22, 1
      %p191 = por %p189, %p190
      %p192 = scmp.ne.s32.totalorder %s184, %s187
      %p193 = scmp.eq.s32.totalorder %s22, 0
      %p194 = por %p192, %p193
      %p195 = scmp.ne.s32.totalorder %s184, %s187
      %p196 = scmp.eq.s32.totalorder %s27, 1
      %p197 = por %p195, %p196
      %p198 = scmp.ne.s32.totalorder %s187, %s188
      %p199 = scmp.eq.s32.totalorder %s27, 0
      %p200 = por %p198, %p199
      %p201 = scmp.ne.s32.totalorder %s187, %s188
      %p202 = scmp.eq.s32.totalorder %s28, 1
      %p203 = por %p201, %p202
      %p205 = scmp.ne.s32.totalorder %s188, %s204
      %p206 = scmp.eq.s32.totalorder %s28, 0
      %p207 = por %p205, %p206
      %s208 = ssub.s32 %s22, %s29
      %p209 = scmp.eq.s32.totalorder %s208, 0
      %s211 = sadd.s32 %s210, 1
      %s212 = scalar_select %p209, %s210, %s211
      %p215 = pneg %p209
      %p216 = scmp.eq.s32.totalorder %s22, 1
      %p217 = por %p215, %p216
      %p218 = scmp.ne.s32.totalorder %s210, %s213
      %p219 = scmp.eq.s32.totalorder %s22, 0
      %p220 = por %p218, %p219
      %p221 = scmp.ne.s32.totalorder %s210, %s213
      %p222 = scmp.eq.s32.totalorder %s27, 1
      %p223 = por %p221, %p222
      %p224 = scmp.ne.s32.totalorder %s213, %s214
      %p225 = scmp.eq.s32.totalorder %s27, 0
      %p226 = por %p224, %p225
      %p227 = scmp.ne.s32.totalorder %s213, %s214
      %p228 = scmp.eq.s32.totalorder %s28, 1
      %p229 = por %p227, %p228
      %p231 = scmp.ne.s32.totalorder %s214, %s230
      %p232 = scmp.eq.s32.totalorder %s28, 0
      %p233 = por %p231, %p232
      %s234 = ssub.s32 %s22, %s29
      %p235 = scmp.eq.s32.totalorder %s234, 0
      %s237 = sadd.s32 %s236, 1
      %s238 = scalar_select %p235, %s236, %s237
      %p241 = pneg %p235
      %p242 = scmp.eq.s32.totalorder %s22, 1
      %p243 = por %p241, %p242
      %p244 = scmp.ne.s32.totalorder %s236, %s239
      %p245 = scmp.eq.s32.totalorder %s22, 0
      %p246 = por %p244, %p245
      %p247 = scmp.ne.s32.totalorder %s236, %s239
      %p248 = scmp.eq.s32.totalorder %s27, 1
      %p249 = por %p247, %p248
      %p250 = scmp.ne.s32.totalorder %s239, %s240
      %p251 = scmp.eq.s32.totalorder %s27, 0
      %p252 = por %p250, %p251
      %p253 = scmp.ne.s32.totalorder %s239, %s240
      %p254 = scmp.eq.s32.totalorder %s28, 1
      %p255 = por %p253, %p254
      %p257 = scmp.ne.s32.totalorder %s240, %s256
      %p258 = scmp.eq.s32.totalorder %s28, 0
      %p259 = por %p257, %p258
      %p260 = scmp.le.s32.totalorder 1, %s22
      %p261 = scmp.lt.s32.totalorder %s22, 3
      %p262 = pnand %p260, %p261
      %p263 = pneg %p262
      // Predicated region
      $region9: #{tpu_custom_call.1} parent=5 // pred_check
        _
      $region10: #{tpu_custom_call.1} parent=5 // pred_check_branch
        %265 = sbr.rel (%p262) target = $region12
      $region11: #{tpu_custom_call.1} parent=5 // pred_region
        %s266 = ssub.s32 %s22, 1
        // Predicated region
        $region13: #{tpu_custom_call.1} parent=11 // pred_check
          %p267 = pneg %p69
        $region14: #{tpu_custom_call.1} parent=11 // pred_check_branch
          %269 = sbr.rel (%p267) target = $region16
        $region15: #{tpu_custom_call.1} parent=11 // pred_region
          %s271 = ssub.s32 512, 512
          %272 = vsyncadd [#allocation4], %s271
          %s273 = sshll.u32 [#allocation3], 4
          %s274 = int_to_ptr.vmem [resolvable:$true] %s273
          %279 = dma.hbm_to_vmem [thread:$0]  %s1, 512, %s274, [#allocation4], 128, 128, 8
        $region16: #{tpu_custom_call.1} parent=11 // pred_fallthru
          _
        // Predicated region
        $region17: #{tpu_custom_call.1} parent=11 // pred_check
          %p280 = pneg %p90
        $region18: #{tpu_custom_call.1} parent=11 // pred_check_branch
          %282 = sbr.rel (%p280) target = $region20
        $region19: #{tpu_custom_call.1} parent=11 // pred_region
          _
        $region20: #{tpu_custom_call.1} parent=11 // pred_fallthru
          _
        // Predicated region
        $region21: #{tpu_custom_call.1} parent=11 // pred_check
          %p283 = pneg %p111
        $region22: #{tpu_custom_call.1} parent=11 // pred_check_branch
          %285 = sbr.rel (%p283) target = $region24
        $region23: #{tpu_custom_call.1} parent=11 // pred_region
          _
        $region24: #{tpu_custom_call.1} parent=11 // pred_fallthru
          _
        // Predicated region
        $region25: #{tpu_custom_call.1} parent=11 // pred_check
          %p286 = pneg %p132
        $region26: #{tpu_custom_call.1} parent=11 // pred_check_branch
          %288 = sbr.rel (%p286) target = $region28
        $region27: #{tpu_custom_call.1} parent=11 // pred_region
          _
        $region28: #{tpu_custom_call.1} parent=11 // pred_fallthru
          _
        // Predicated region
        $region29: #{tpu_custom_call.1} parent=11 // pred_check
          %p289 = pneg %p153
        $region30: #{tpu_custom_call.1} parent=11 // pred_check_branch
          %291 = sbr.rel (%p289) target = $region32
        $region31: #{tpu_custom_call.1} parent=11 // pred_region
          _
        $region32: #{tpu_custom_call.1} parent=11 // pred_fallthru
          _
        // Predicated region
        $region33: #{tpu_custom_call.1} parent=11 // pred_check
          %p292 = pneg %p174
        $region34: #{tpu_custom_call.1} parent=11 // pred_check_branch
          %294 = sbr.rel (%p292) target = $region36
        $region35: #{tpu_custom_call.1} parent=11 // pred_region
          _
        $region36: #{tpu_custom_call.1} parent=11 // pred_fallthru
          _
      $region12: #{tpu_custom_call.1} parent=5 // pred_fallthru
        _
      %p295 = scmp.lt.s32.totalorder %s22, 2
      // Predicated region
      $region37: #{tpu_custom_call.1} parent=5 // pred_check
        %p296 = pneg %p295
      $region38: #{tpu_custom_call.1} parent=5 // pred_check_branch
        %298 = sbr.rel (%p296) target = $region40
      $region39: #{tpu_custom_call.1} parent=5 // pred_region
        // Predicated region
        $region41: #{tpu_custom_call.1} parent=39 // pred_check
          %p299 = pneg %p42
        $region42: #{tpu_custom_call.1} parent=39 // pred_check_branch
          %301 = sbr.rel (%p299) target = $region44
        $region43: #{tpu_custom_call.1} parent=39 // pred_region
          %s302 = smul.u32 16, %s22
          %p303 = scmp.lt.s32.totalorder %s302, 31
          %s304 = scalar_select %p303, %s302, 31
          %s305 = smul.addr %s304, 8
          %s306 = scalar_lea.vmem %s0, %s305
          %s307 = smul.u32 16, %s22
        $region44: #{tpu_custom_call.1} parent=39 // pred_fallthru
          _
        // Predicated region
        $region45: #{tpu_custom_call.1} parent=39 // pred_check
          %p308 = pneg %p194
        $region46: #{tpu_custom_call.1} parent=39 // pred_check_branch
          %310 = sbr.rel (%p308) target = $region48
        $region47: #{tpu_custom_call.1} parent=39 // pred_region
          %s311 = smul.u32 16, %s22
          %p312 = scmp.lt.s32.totalorder %s311, 31
          %s313 = scalar_select %p312, %s311, 31
          %s314 = smul.addr %s313, 8
          %s315 = scalar_lea.vmem %s7, %s314
          %s316 = smul.u32 16, %s22
        $region48: #{tpu_custom_call.1} parent=39 // pred_fallthru
          _
      $region40: #{tpu_custom_call.1} parent=5 // pred_fallthru
        _
      %p317 = scmp.le.s32.totalorder 1, %s22
      %p318 = scmp.lt.s32.totalorder %s22, 3
      %p319 = pnand %p317, %p318
      %p320 = pneg %p319
      // Predicated region
      $region49: #{tpu_custom_call.1} parent=5 // pred_check
        _
      $region50: #{tpu_custom_call.1} parent=5 // pred_check_branch
        %322 = sbr.rel (%p319) target = $region52
      $region51: #{tpu_custom_call.1} parent=5 // pred_region
        %s323 = ssub.s32 %s22, 1
        // Predicated region
        $region53: #{tpu_custom_call.1} parent=51 // pred_check
          %p324 = pneg %p69
        $region54: #{tpu_custom_call.1} parent=51 // pred_check_branch
          %326 = sbr.rel (%p324) target = $region56
        $region55: #{tpu_custom_call.1} parent=51 // pred_region
          %327 = dma.done [#allocation4], 512
        $region56: #{tpu_custom_call.1} parent=51 // pred_fallthru
          _
        %s328 = smul.u32 16, %s27
        %p329 = scmp.lt.s32.totalorder %s328, 31
        %s330 = scalar_select %p329, %s328, 31
        %s331 = smul.addr %s330, 8
        %s332 = scalar_lea.vmem %s0, %s331
        %p333 = pneg %p48
        %p334 = pneg %p45
        %p335 = pneg %p69
        %p336 = pneg %p66
        %p337 = pneg %p90
        %p338 = pneg %p87
        %p339 = pneg %p111
        %p340 = pneg %p108
        %p341 = pneg %p132
        %p342 = pneg %p129
        %p343 = pneg %p153
        %p344 = pneg %p150
        %p345 = pneg %p174
        %p346 = pneg %p171
        %s347 = smul.u32 16, %s27
        %p348 = scmp.lt.s32.totalorder %s347, 31
        %s349 = scalar_select %p348, %s347, 31
        %s350 = smul.addr %s349, 8
        %s351 = scalar_lea.vmem %s7, %s350
        %p352 = pneg %p200
        %p353 = pneg %p197
        %p354 = pneg %p226
        %p355 = pneg %p223
        %s356 = sand.u32 %s213, 1
        %s357 = scalar_lea.sflag [#allocation5], %s356
        %s358 = sand.u32 %s213, 1
        %s359 = smul.addr %s358, 128
        %s360 = scalar_lea.vmem [#allocation6], %s359
        %p361 = pneg %p252
        %p362 = pneg %p249
        %s363 = smul.u32 16, %s27
        %p364 = scmp.lt.s32.totalorder %s363, 31
        %s365 = scalar_select %p364, %s363, 31
        %s366 = smul.addr %s365, 8
        %s367 = scalar_lea.vmem %s9, %s366
        %s368 = smul.u32 16, %s27
        %p369 = scmp.lt.s32.totalorder %s368, 31
        %s370 = scalar_select %p369, %s368, 31
        %s371 = smul.addr %s370, 8
        %s372 = scalar_lea.vmem %s0, %s371
        %s373 = smul.u32 16, %s27
        %s374 = smul.u32 16, %s27
        %p375 = scmp.lt.s32.totalorder %s374, 31
        %s376 = scalar_select %p375, %s374, 31
        %s377 = smul.addr %s376, 8
        %s378 = scalar_lea.vmem %s7, %s377
        %s379 = smul.u32 16, %s27
        %s380 = smul.u32 16, %s27
        %s381 = smul.u32 16, %s27
        %p382 = scmp.lt.s32.totalorder %s381, 31
        %s383 = scalar_select %p382, %s381, 31
        %s384 = smul.addr %s383, 8
        %s385 = scalar_lea.vmem %s9, %s384
        %s386 = smul.u32 16, %s27
        %v387 = vld [vmem:[%s372] sm:$0xff]
        %v388 = vld [vmem:[%s372 + $0x8] sm:$0xff]
        %v389 = vld [vmem:[%s372 + $0x10] sm:$0xff]
        %v390 = vld [vmem:[%s372 + $0x18] sm:$0xff]
        %v391 = vld [vmem:[%s372 + $0x20] sm:$0xff]
        %v392 = vld [vmem:[%s372 + $0x28] sm:$0xff]
        %v393 = vld [vmem:[%s372 + $0x30] sm:$0xff]
        %v394 = vld [vmem:[%s372 + $0x38] sm:$0xff]
        %v395 = vld [vmem:[%s372 + $0x40] sm:$0xff]
        %v396 = vld [vmem:[%s372 + $0x48] sm:$0xff]
        %v397 = vld [vmem:[%s372 + $0x50] sm:$0xff]
        %v398 = vld [vmem:[%s372 + $0x58] sm:$0xff]
        %v399 = vld [vmem:[%s372 + $0x60] sm:$0xff]
        %v400 = vld [vmem:[%s372 + $0x68] sm:$0xff]
        %v401 = vld [vmem:[%s372 + $0x70] sm:$0xff]
        %v402 = vld [vmem:[%s372 + $0x78] sm:$0xff]
        %v403 = vld [vmem:[#allocation3] sm:$0xff]
        %v404 = vld [vmem:[#allocation3 + $0x8] sm:$0xff]
        %v405 = vld [vmem:[#allocation3 + $0x10] sm:$0xff]
        %v406 = vld [vmem:[#allocation3 + $0x18] sm:$0xff]
        %v407 = vld [vmem:[%s2] sm:$0x1]
        %v409 = vlaneseq
        %v410 = vshrl.u32 %v409, 7
        %v411 = vsub.s32 0, %v410
        %v412 = vrot.slane %v407, %v411
        %vm414 = vcmask 261120
        %v416 = vsel %vm414, %v387, 0
        %v419 = vsel %vm414, %v388, 0
        %v422 = vsel %vm414, %v389, 0
        %v425 = vsel %vm414, %v390, 0
        %v428 = vsel %vm414, %v391, 0
        %v431 = vsel %vm414, %v392, 0
        %v434 = vsel %vm414, %v393, 0
        %v437 = vsel %vm414, %v394, 0
        %v440 = vsel %vm414, %v395, 0
        %v443 = vsel %vm414, %v396, 0
        %v446 = vsel %vm414, %v397, 0
        %v449 = vsel %vm414, %v398, 0
        %v452 = vsel %vm414, %v399, 0
        %v455 = vsel %vm414, %v400, 0
        %v458 = vsel %vm414, %v401, 0
        %v461 = vsel %vm414, %v402, 0
        %463 = vmatprep.subr.mxu0 0.0
        %464 = vmatpush1.msra.mxu0 %v403
        %465 = vmatprep.subr.mxu0 0.0
        %466 = vmatpush1.msra.mxu0 %v404
        %467 = vmatprep.subr.mxu0 0.0
        %468 = vmatpush1.msra.mxu0 %v405
        %469 = vmatprep.subr.mxu0 0.0
        %470 = vmatpush1.msra.mxu0 %v406
        %471 = vmatprep.subr.mxu0 0.0
        %472 = vmatpush1.msra.mxu0 0.0
        %473 = vmatprep.subr.mxu0 0.0
        %474 = vmatpush1.msra.mxu0 0.0
        %475 = vmatprep.subr.mxu0 0.0
        %476 = vmatpush1.msra.mxu0 0.0
        %477 = vmatprep.subr.mxu0 0.0
        %478 = vmatpush1.msra.mxu0 0.0
        %479 = vmatprep.subr.mxu0 0.0
        %480 = vmatpush1.msra.mxu0 0.0
        %481 = vmatprep.subr.mxu0 0.0
        %482 = vmatpush1.msra.mxu0 0.0
        %483 = vmatprep.subr.mxu0 0.0
        %484 = vmatpush1.msra.mxu0 0.0
        %485 = vmatprep.subr.mxu0 0.0
        %486 = vmatpush1.msra.mxu0 0.0
        %487 = vmatprep.subr.mxu0 0.0
        %488 = vmatpush1.msra.mxu0 0.0
        %489 = vmatprep.subr.mxu0 0.0
        %490 = vmatpush1.msra.mxu0 0.0
        %491 = vmatprep.subr.mxu0 0.0
        %492 = vmatpush1.msra.mxu0 0.0
        %493 = vmatprep.subr.mxu0 0.0
        %494 = vmatpush1.msra.mxu0 0.0
        %495 = vmatprep.subr.mxu0 0.0
        %496 = vmatpush1.msra.mxu0 0.0
        %497 = vmatprep.subr.mxu0 0.0
        %498 = vmatpush1.msra.mxu0 0.0
        %499 = vmatprep.subr.mxu0 0.0
        %500 = vmatpush1.msra.mxu0 0.0
        %501 = vmatprep.subr.mxu0 0.0
        %502 = vmatpush1.msra.mxu0 0.0
        %503 = vmatprep.subr.mxu0 0.0
        %504 = vmatpush1.msra.mxu0 0.0
        %505 = vmatprep.subr.mxu0 0.0
        %506 = vmatpush1.msra.mxu0 0.0
        %507 = vmatprep.subr.mxu0 0.0
        %508 = vmatpush1.msra.mxu0 0.0
        %509 = vmatprep.subr.mxu0 0.0
        %510 = vmatpush1.msra.mxu0 0.0
        %511 = vmatprep.subr.mxu0 0.0
        %512 = vmatpush1.msra.mxu0 0.0
        %513 = vmatprep.subr.mxu0 0.0
        %514 = vmatpush1.msra.mxu0 0.0
        %515 = vmatprep.subr.mxu0 0.0
        %516 = vmatpush1.msra.mxu0 0.0
        %517 = vmatprep.subr.mxu0 0.0
        %518 = vmatpush1.msra.mxu0 0.0
        %519 = vmatprep.subr.mxu0 0.0
        %520 = vmatpush1.msra.mxu0 0.0
        %521 = vmatprep.subr.mxu0 0.0
        %522 = vmatpush1.msra.mxu0 0.0
        %523 = vmatprep.subr.mxu0 0.0
        %524 = vmatpush1.msra.mxu0 0.0
        %525 = vmatprep.subr.mxu0 0.0
        %526 = vmatpush1.msra.mxu0 0.0
        %527 = vmatprep.mubr.f32.mxu0 0.0
        %528 = vmatmul.mubr.f32.gmra.mrb[0].mxu0 %v416
        %v529 = vpop.f32.mrb[0].mxu0
        %v530 = vadd.f32 %v412, %v529
        %v531 = vpop.f32.mrb[0].mxu0
        %532 = vmatprep.mubr.f32.mxu0 0.0
        %533 = vmatmul.mubr.f32.gmra.mrb[0].mxu0 %v419
        %v534 = vpop.f32.mrb[0].mxu0
        %v535 = vadd.f32 %v412, %v534
        %v536 = vpop.f32.mrb[0].mxu0
        %537 = vmatprep.mubr.f32.mxu0 0.0
        %538 = vmatmul.mubr.f32.gmra.mrb[0].mxu0 %v422
        %v539 = vpop.f32.mrb[0].mxu0
        %v540 = vadd.f32 %v412, %v539
        %v541 = vpop.f32.mrb[0].mxu0
        %542 = vmatprep.mubr.f32.mxu0 0.0
        %543 = vmatmul.mubr.f32.gmra.mrb[0].mxu0 %v425
        %v544 = vpop.f32.mrb[0].mxu0
        %v545 = vadd.f32 %v412, %v544
        %v546 = vpop.f32.mrb[0].mxu0
        %547 = vmatprep.mubr.f32.mxu0 0.0
        %548 = vmatmul.mubr.f32.gmra.mrb[0].mxu0 %v428
        %v549 = vpop.f32.mrb[0].mxu0
        %v550 = vadd.f32 %v412, %v549
        %v551 = vpop.f32.mrb[0].mxu0
        %552 = vmatprep.mubr.f32.mxu0 0.0
        %553 = vmatmul.mubr.f32.gmra.mrb[0].mxu0 %v431
        %v554 = vpop.f32.mrb[0].mxu0
        %v555 = vadd.f32 %v412, %v554
        %v556 = vpop.f32.mrb[0].mxu0
        %557 = vmatprep.mubr.f32.mxu0 0.0
        %558 = vmatmul.mubr.f32.gmra.mrb[0].mxu0 %v434
        %v559 = vpop.f32.mrb[0].mxu0
        %v560 = vadd.f32 %v412, %v559
        %v561 = vpop.f32.mrb[0].mxu0
        %562 = vmatprep.mubr.f32.mxu0 0.0
        %563 = vmatmul.mubr.f32.gmra.mrb[0].mxu0 %v437
        %v564 = vpop.f32.mrb[0].mxu0
        %v565 = vadd.f32 %v412, %v564
        %v566 = vpop.f32.mrb[0].mxu0
        %567 = vmatprep.mubr.f32.mxu0 0.0
        %568 = vmatmul.mubr.f32.gmra.mrb[0].mxu0 %v440
        %v569 = vpop.f32.mrb[0].mxu0
        %v570 = vadd.f32 %v412, %v569
        %v571 = vpop.f32.mrb[0].mxu0
        %572 = vmatprep.mubr.f32.mxu0 0.0
        %573 = vmatmul.mubr.f32.gmra.mrb[0].mxu0 %v443
        %v574 = vpop.f32.mrb[0].mxu0
        %v575 = vadd.f32 %v412, %v574
        %v576 = vpop.f32.mrb[0].mxu0
        %577 = vmatprep.mubr.f32.mxu0 0.0
        %578 = vmatmul.mubr.f32.gmra.mrb[0].mxu0 %v446
        %v579 = vpop.f32.mrb[0].mxu0
        %v580 = vadd.f32 %v412, %v579
        %v581 = vpop.f32.mrb[0].mxu0
        %582 = vmatprep.mubr.f32.mxu0 0.0
        %583 = vmatmul.mubr.f32.gmra.mrb[0].mxu0 %v449
        %v584 = vpop.f32.mrb[0].mxu0
        %v585 = vadd.f32 %v412, %v584
        %v586 = vpop.f32.mrb[0].mxu0
        %587 = vmatprep.mubr.f32.mxu0 0.0
        %588 = vmatmul.mubr.f32.gmra.mrb[0].mxu0 %v452
        %v589 = vpop.f32.mrb[0].mxu0
        %v590 = vadd.f32 %v412, %v589
        %v591 = vpop.f32.mrb[0].mxu0
        %592 = vmatprep.mubr.f32.mxu0 0.0
        %593 = vmatmul.mubr.f32.gmra.mrb[0].mxu0 %v455
        %v594 = vpop.f32.mrb[0].mxu0
        %v595 = vadd.f32 %v412, %v594
        %v596 = vpop.f32.mrb[0].mxu0
        %597 = vmatprep.mubr.f32.mxu0 0.0
        %598 = vmatmul.mubr.f32.gmra.mrb[0].mxu0 %v458
        %v599 = vpop.f32.mrb[0].mxu0
        %v600 = vadd.f32 %v412, %v599
        %v601 = vpop.f32.mrb[0].mxu0
        %602 = vmatprep.mubr.f32.mxu0 0.0
        %603 = vmatmul.mubr.f32.gmra.mrb[0].mxu0 %v461
        %v604 = vpop.f32.mrb[0].mxu0
        %v605 = vadd.f32 %v412, %v604
        %v606 = vpop.f32.mrb[0].mxu0
        %607 = vdwg.mxu0
        %v608 = vmax.f32 %v530, 0.0
        %v609 = vmax.f32 %v535, 0.0
        %v610 = vmax.f32 %v540, 0.0
        %v611 = vmax.f32 %v545, 0.0
        %v612 = vmax.f32 %v550, 0.0
        %v613 = vmax.f32 %v555, 0.0
        %v614 = vmax.f32 %v560, 0.0
        %v615 = vmax.f32 %v565, 0.0
        %v616 = vmax.f32 %v570, 0.0
        %v617 = vmax.f32 %v575, 0.0
        %v618 = vmax.f32 %v580, 0.0
        %v619 = vmax.f32 %v585, 0.0
        %v620 = vmax.f32 %v590, 0.0
        %v621 = vmax.f32 %v595, 0.0
        %v622 = vmax.f32 %v600, 0.0
        %v623 = vmax.f32 %v605, 0.0
        %v624 = vld [vmem:[%s3] sm:$0xff]
        %v625 = vld [vmem:[%s3 + $0x8] sm:$0xff]
        %v626 = vld [vmem:[%s3 + $0x10] sm:$0xff]
        %v627 = vld [vmem:[%s3 + $0x18] sm:$0xff]
        %v628 = vld [vmem:[%s3 + $0x20] sm:$0xff]
        %v629 = vld [vmem:[%s3 + $0x28] sm:$0xff]
        %v630 = vld [vmem:[%s3 + $0x30] sm:$0xff]
        %v631 = vld [vmem:[%s3 + $0x38] sm:$0xff]
        %v632 = vld [vmem:[%s4] sm:$0x1]
        %v634 = vlaneseq
        %v635 = vshrl.u32 %v634, 7
        %v636 = vsub.s32 0, %v635
        %v637 = vrot.slane %v632, %v636
        %vm639 = vcmask 523264
        %v641 = vsel %vm639, %v608, 0
        %v644 = vsel %vm639, %v609, 0
        %v647 = vsel %vm639, %v610, 0
        %v650 = vsel %vm639, %v611, 0
        %v653 = vsel %vm639, %v612, 0
        %v656 = vsel %vm639, %v613, 0
        %v659 = vsel %vm639, %v614, 0
        %v662 = vsel %vm639, %v615, 0
        %v665 = vsel %vm639, %v616, 0
        %v668 = vsel %vm639, %v617, 0
        %v671 = vsel %vm639, %v618, 0
        %v674 = vsel %vm639, %v619, 0
        %v677 = vsel %vm639, %v620, 0
        %v680 = vsel %vm639, %v621, 0
        %v683 = vsel %vm639, %v622, 0
        %v686 = vsel %vm639, %v623, 0
        %688 = vmatprep.subr.mxu0 0.0
        %689 = vmatpush1.msra.mxu0 %v624
        %690 = vmatprep.subr.mxu0 0.0
        %691 = vmatpush1.msra.mxu0 %v625
        %692 = vmatprep.subr.mxu0 0.0
        %693 = vmatpush1.msra.mxu0 %v626
        %694 = vmatprep.subr.mxu0 0.0
        %695 = vmatpush1.msra.mxu0 %v627
        %696 = vmatprep.subr.mxu0 0.0
        %697 = vmatpush1.msra.mxu0 %v628
        %698 = vmatprep.subr.mxu0 0.0
        %699 = vmatpush1.msra.mxu0 %v629
        %700 = vmatprep.subr.mxu0 0.0
        %701 = vmatpush1.msra.mxu0 %v630
        %702 = vmatprep.subr.mxu0 0.0
        %703 = vmatpush1.msra.mxu0 %v631
        %704 = vmatprep.subr.mxu0 0.0
        %705 = vmatpush1.msra.mxu0 0.0
        %706 = vmatprep.subr.mxu0 0.0
        %707 = vmatpush1.msra.mxu0 0.0
        %708 = vmatprep.subr.mxu0 0.0
        %709 = vmatpush1.msra.mxu0 0.0
        %710 = vmatprep.subr.mxu0 0.0
        %711 = vmatpush1.msra.mxu0 0.0
        %712 = vmatprep.subr.mxu0 0.0
        %713 = vmatpush1.msra.mxu0 0.0
        %714 = vmatprep.subr.mxu0 0.0
        %715 = vmatpush1.msra.mxu0 0.0
        %716 = vmatprep.subr.mxu0 0.0
        %717 = vmatpush1.msra.mxu0 0.0
        %718 = vmatprep.subr.mxu0 0.0
        %719 = vmatpush1.msra.mxu0 0.0
        %720 = vmatprep.subr.mxu0 0.0
        %721 = vmatpush1.msra.mxu0 0.0
        %722 = vmatprep.subr.mxu0 0.0
        %723 = vmatpush1.msra.mxu0 0.0
        %724 = vmatprep.subr.mxu0 0.0
        %725 = vmatpush1.msra.mxu0 0.0
        %726 = vmatprep.subr.mxu0 0.0
        %727 = vmatpush1.msra.mxu0 0.0
        %728 = vmatprep.subr.mxu0 0.0
        %729 = vmatpush1.msra.mxu0 0.0
        %730 = vmatprep.subr.mxu0 0.0
        %731 = vmatpush1.msra.mxu0 0.0
        %732 = vmatprep.subr.mxu0 0.0
        %733 = vmatpush1.msra.mxu0 0.0
        %734 = vmatprep.subr.mxu0 0.0
        %735 = vmatpush1.msra.mxu0 0.0
        %736 = vmatprep.subr.mxu0 0.0
        %737 = vmatpush1.msra.mxu0 0.0
        %738 = vmatprep.subr.mxu0 0.0
        %739 = vmatpush1.msra.mxu0 0.0
        %740 = vmatprep.subr.mxu0 0.0
        %741 = vmatpush1.msra.mxu0 0.0
        %742 = vmatprep.subr.mxu0 0.0
        %743 = vmatpush1.msra.mxu0 0.0
        %744 = vmatprep.subr.mxu0 0.0
        %745 = vmatpush1.msra.mxu0 0.0
        %746 = vmatprep.subr.mxu0 0.0
        %747 = vmatpush1.msra.mxu0 0.0
        %748 = vmatprep.subr.mxu0 0.0
        %749 = vmatpush1.msra.mxu0 0.0
        %750 = vmatprep.subr.mxu0 0.0
        %751 = vmatpush1.msra.mxu0 0.0
        %752 = vmatprep.mubr.f32.mxu0 0.0
        %753 = vmatmul.mubr.f32.gmra.mrb[0].mxu0 %v641
        %v754 = vpop.f32.mrb[0].mxu0
        %v755 = vadd.f32 %v637, %v754
        %v756 = vpop.f32.mrb[0].mxu0
        %757 = vmatprep.mubr.f32.mxu0 0.0
        %758 = vmatmul.mubr.f32.gmra.mrb[0].mxu0 %v644
        %v759 = vpop.f32.mrb[0].mxu0
        %v760 = vadd.f32 %v637, %v759
        %v761 = vpop.f32.mrb[0].mxu0
        %762 = vmatprep.mubr.f32.mxu0 0.0
        %763 = vmatmul.mubr.f32.gmra.mrb[0].mxu0 %v647
        %v764 = vpop.f32.mrb[0].mxu0
        %v765 = vadd.f32 %v637, %v764
        %v766 = vpop.f32.mrb[0].mxu0
        %767 = vmatprep.mubr.f32.mxu0 0.0
        %768 = vmatmul.mubr.f32.gmra.mrb[0].mxu0 %v650
        %v769 = vpop.f32.mrb[0].mxu0
        %v770 = vadd.f32 %v637, %v769
        %v771 = vpop.f32.mrb[0].mxu0
        %772 = vmatprep.mubr.f32.mxu0 0.0
        %773 = vmatmul.mubr.f32.gmra.mrb[0].mxu0 %v653
        %v774 = vpop.f32.mrb[0].mxu0
        %v775 = vadd.f32 %v637, %v774
        %v776 = vpop.f32.mrb[0].mxu0
        %777 = vmatprep.mubr.f32.mxu0 0.0
        %778 = vmatmul.mubr.f32.gmra.mrb[0].mxu0 %v656
        %v779 = vpop.f32.mrb[0].mxu0
        %v780 = vadd.f32 %v637, %v779
        %v781 = vpop.f32.mrb[0].mxu0
        %782 = vmatprep.mubr.f32.mxu0 0.0
        %783 = vmatmul.mubr.f32.gmra.mrb[0].mxu0 %v659
        %v784 = vpop.f32.mrb[0].mxu0
        %v785 = vadd.f32 %v637, %v784
        %v786 = vpop.f32.mrb[0].mxu0
        %787 = vmatprep.mubr.f32.mxu0 0.0
        %788 = vmatmul.mubr.f32.gmra.mrb[0].mxu0 %v662
        %v789 = vpop.f32.mrb[0].mxu0
        %v790 = vadd.f32 %v637, %v789
        %v791 = vpop.f32.mrb[0].mxu0
        %792 = vmatprep.mubr.f32.mxu0 0.0
        %793 = vmatmul.mubr.f32.gmra.mrb[0].mxu0 %v665
        %v794 = vpop.f32.mrb[0].mxu0
        %v795 = vadd.f32 %v637, %v794
        %v796 = vpop.f32.mrb[0].mxu0
        %797 = vmatprep.mubr.f32.mxu0 0.0
        %798 = vmatmul.mubr.f32.gmra.mrb[0].mxu0 %v668
        %v799 = vpop.f32.mrb[0].mxu0
        %v800 = vadd.f32 %v637, %v799
        %v801 = vpop.f32.mrb[0].mxu0
        %802 = vmatprep.mubr.f32.mxu0 0.0
        %803 = vmatmul.mubr.f32.gmra.mrb[0].mxu0 %v671
        %v804 = vpop.f32.mrb[0].mxu0
        %v805 = vadd.f32 %v637, %v804
        %v806 = vpop.f32.mrb[0].mxu0
        %807 = vmatprep.mubr.f32.mxu0 0.0
        %808 = vmatmul.mubr.f32.gmra.mrb[0].mxu0 %v674
        %v809 = vpop.f32.mrb[0].mxu0
        %v810 = vadd.f32 %v637, %v809
        %v811 = vpop.f32.mrb[0].mxu0
        %812 = vmatprep.mubr.f32.mxu0 0.0
        %813 = vmatmul.mubr.f32.gmra.mrb[0].mxu0 %v677
        %v814 = vpop.f32.mrb[0].mxu0
        %v815 = vadd.f32 %v637, %v814
        %v816 = vpop.f32.mrb[0].mxu0
        %817 = vmatprep.mubr.f32.mxu0 0.0
        %818 = vmatmul.mubr.f32.gmra.mrb[0].mxu0 %v680
        %v819 = vpop.f32.mrb[0].mxu0
        %v820 = vadd.f32 %v637, %v819
        %v821 = vpop.f32.mrb[0].mxu0
        %822 = vmatprep.mubr.f32.mxu0 0.0
        %823 = vmatmul.mubr.f32.gmra.mrb[0].mxu0 %v683
        %v824 = vpop.f32.mrb[0].mxu0
        %v825 = vadd.f32 %v637, %v824
        %v826 = vpop.f32.mrb[0].mxu0
        %827 = vmatprep.mubr.f32.mxu0 0.0
        %828 = vmatmul.mubr.f32.gmra.mrb[0].mxu0 %v686
        %v829 = vpop.f32.mrb[0].mxu0
        %v830 = vadd.f32 %v637, %v829
        %v831 = vpop.f32.mrb[0].mxu0
        %832 = vdwg.mxu0
        %833 = vmax.xlane.f32.xlu0 %v755
        %v834 = vpop.xlane.xlu0 %833
        %835 = vmax.xlane.f32.xlu0 %v760
        %v836 = vpop.xlane.xlu0 %835
        %837 = vmax.xlane.f32.xlu0 %v765
        %v838 = vpop.xlane.xlu0 %837
        %839 = vmax.xlane.f32.xlu0 %v770
        %v840 = vpop.xlane.xlu0 %839
        %841 = vmax.xlane.f32.xlu0 %v775
        %v842 = vpop.xlane.xlu0 %841
        %843 = vmax.xlane.f32.xlu0 %v780
        %v844 = vpop.xlane.xlu0 %843
        %845 = vmax.xlane.f32.xlu0 %v785
        %v846 = vpop.xlane.xlu0 %845
        %847 = vmax.xlane.f32.xlu0 %v790
        %v848 = vpop.xlane.xlu0 %847
        %849 = vmax.xlane.f32.xlu0 %v795
        %v850 = vpop.xlane.xlu0 %849
        %851 = vmax.xlane.f32.xlu0 %v800
        %v852 = vpop.xlane.xlu0 %851
        %853 = vmax.xlane.f32.xlu0 %v805
        %v854 = vpop.xlane.xlu0 %853
        %855 = vmax.xlane.f32.xlu0 %v810
        %v856 = vpop.xlane.xlu0 %855
        %857 = vmax.xlane.f32.xlu0 %v815
        %v858 = vpop.xlane.xlu0 %857
        %859 = vmax.xlane.f32.xlu0 %v820
        %v860 = vpop.xlane.xlu0 %859
        %861 = vmax.xlane.f32.xlu0 %v825
        %v862 = vpop.xlane.xlu0 %861
        %863 = vmax.xlane.f32.xlu0 %v830
        %v864 = vpop.xlane.xlu0 %863
        %v865 = vsub.f32 %v755, %v834
        %v866 = vsub.f32 %v760, %v836
        %v867 = vsub.f32 %v765, %v838
        %v868 = vsub.f32 %v770, %v840
        %v869 = vsub.f32 %v775, %v842
        %v870 = vsub.f32 %v780, %v844
        %v871 = vsub.f32 %v785, %v846
        %v872 = vsub.f32 %v790, %v848
        %v873 = vsub.f32 %v795, %v850
        %v874 = vsub.f32 %v800, %v852
        %v875 = vsub.f32 %v805, %v854
        %v876 = vsub.f32 %v810, %v856
        %v877 = vsub.f32 %v815, %v858
        %v878 = vsub.f32 %v820, %v860
        %v879 = vsub.f32 %v825, %v862
        %v880 = vsub.f32 %v830, %v864
        %v881 = vmul.f32 %v865, 1.442695
        %v882 = vpow.pop %v881
        %v883 = vmul.f32 %v866, 1.442695
        %v884 = vpow.pop %v883
        %v885 = vmul.f32 %v867, 1.442695
        %v886 = vpow.pop %v885
        %v887 = vmul.f32 %v868, 1.442695
        %v888 = vpow.pop %v887
        %v889 = vmul.f32 %v869, 1.442695
        %v890 = vpow.pop %v889
        %v891 = vmul.f32 %v870, 1.442695
        %v892 = vpow.pop %v891
        %v893 = vmul.f32 %v871, 1.442695
        %v894 = vpow.pop %v893
        %v895 = vmul.f32 %v872, 1.442695
        %v896 = vpow.pop %v895
        %v897 = vmul.f32 %v873, 1.442695
        %v898 = vpow.pop %v897
        %v899 = vmul.f32 %v874, 1.442695
        %v900 = vpow.pop %v899
        %v901 = vmul.f32 %v875, 1.442695
        %v902 = vpow.pop %v901
        %v903 = vmul.f32 %v876, 1.442695
        %v904 = vpow.pop %v903
        %v905 = vmul.f32 %v877, 1.442695
        %v906 = vpow.pop %v905
        %v907 = vmul.f32 %v878, 1.442695
        %v908 = vpow.pop %v907
        %v909 = vmul.f32 %v879, 1.442695
        %v910 = vpow.pop %v909
        %v911 = vmul.f32 %v880, 1.442695
        %v912 = vpow.pop %v911
        %913 = vadd.xlane.f32.xlu0 %v882
        %v914 = vpop.xlane.xlu0 %913
        %915 = vadd.xlane.f32.xlu0 %v884
        %v916 = vpop.xlane.xlu0 %915
        %917 = vadd.xlane.f32.xlu0 %v886
        %v918 = vpop.xlane.xlu0 %917
        %919 = vadd.xlane.f32.xlu0 %v888
        %v920 = vpop.xlane.xlu0 %919
        %921 = vadd.xlane.f32.xlu0 %v890
        %v922 = vpop.xlane.xlu0 %921
        %923 = vadd.xlane.f32.xlu0 %v892
        %v924 = vpop.xlane.xlu0 %923
        %925 = vadd.xlane.f32.xlu0 %v894
        %v926 = vpop.xlane.xlu0 %925
        %927 = vadd.xlane.f32.xlu0 %v896
        %v928 = vpop.xlane.xlu0 %927
        %929 = vadd.xlane.f32.xlu0 %v898
        %v930 = vpop.xlane.xlu0 %929
        %931 = vadd.xlane.f32.xlu0 %v900
        %v932 = vpop.xlane.xlu0 %931
        %933 = vadd.xlane.f32.xlu0 %v902
        %v934 = vpop.xlane.xlu0 %933
        %935 = vadd.xlane.f32.xlu0 %v904
        %v936 = vpop.xlane.xlu0 %935
        %937 = vadd.xlane.f32.xlu0 %v906
        %v938 = vpop.xlane.xlu0 %937
        %939 = vadd.xlane.f32.xlu0 %v908
        %v940 = vpop.xlane.xlu0 %939
        %941 = vadd.xlane.f32.xlu0 %v910
        %v942 = vpop.xlane.xlu0 %941
        %943 = vadd.xlane.f32.xlu0 %v912
        %v944 = vpop.xlane.xlu0 %943
        %v945 = vlog2.pop %v914
        %v946 = vmul.f32 %v945, 0.6931472
        %v947 = vlog2.pop %v916
        %v948 = vmul.f32 %v947, 0.6931472
        %v949 = vlog2.pop %v918
        %v950 = vmul.f32 %v949, 0.6931472
        %v951 = vlog2.pop %v920
        %v952 = vmul.f32 %v951, 0.6931472
        %v953 = vlog2.pop %v922
        %v954 = vmul.f32 %v953, 0.6931472
        %v955 = vlog2.pop %v924
        %v956 = vmul.f32 %v955, 0.6931472
        %v957 = vlog2.pop %v926
        %v958 = vmul.f32 %v957, 0.6931472
        %v959 = vlog2.pop %v928
        %v960 = vmul.f32 %v959, 0.6931472
        %v961 = vlog2.pop %v930
        %v962 = vmul.f32 %v961, 0.6931472
        %v963 = vlog2.pop %v932
        %v964 = vmul.f32 %v963, 0.6931472
        %v965 = vlog2.pop %v934
        %v966 = vmul.f32 %v965, 0.6931472
        %v967 = vlog2.pop %v936
        %v968 = vmul.f32 %v967, 0.6931472
        %v969 = vlog2.pop %v938
        %v970 = vmul.f32 %v969, 0.6931472
        %v971 = vlog2.pop %v940
        %v972 = vmul.f32 %v971, 0.6931472
        %v973 = vlog2.pop %v942
        %v974 = vmul.f32 %v973, 0.6931472
        %v975 = vlog2.pop %v944
        %v976 = vmul.f32 %v975, 0.6931472
        %v977 = vsub.f32 %v865, %v946
        %v978 = vsub.f32 %v866, %v948
        %v979 = vsub.f32 %v867, %v950
        %v980 = vsub.f32 %v868, %v952
        %v981 = vsub.f32 %v869, %v954
        %v982 = vsub.f32 %v870, %v956
        %v983 = vsub.f32 %v871, %v958
        %v984 = vsub.f32 %v872, %v960
        %v985 = vsub.f32 %v873, %v962
        %v986 = vsub.f32 %v874, %v964
        %v987 = vsub.f32 %v875, %v966
        %v988 = vsub.f32 %v876, %v968
        %v989 = vsub.f32 %v877, %v970
        %v990 = vsub.f32 %v878, %v972
        %v991 = vsub.f32 %v879, %v974
        %v992 = vsub.f32 %v880, %v976
        %v993 = vld [vmem:[%s5] sm:$0x1]
        %v995 = vlaneseq
        %v996 = vshrl.u32 %v995, 7
        %v997 = vsub.s32 0, %v996
        %v998 = vrot.slane %v993, %v997
        %v1000 = vmul.f32 %v387, %v998
        %v1001 = vmul.f32 %v388, %v998
        %v1002 = vmul.f32 %v389, %v998
        %v1003 = vmul.f32 %v390, %v998
        %v1004 = vmul.f32 %v391, %v998
        %v1005 = vmul.f32 %v392, %v998
        %v1006 = vmul.f32 %v393, %v998
        %v1007 = vmul.f32 %v394, %v998
        %v1008 = vmul.f32 %v395, %v998
        %v1009 = vmul.f32 %v396, %v998
        %v1010 = vmul.f32 %v397, %v998
        %v1011 = vmul.f32 %v398, %v998
        %v1012 = vmul.f32 %v399, %v998
        %v1013 = vmul.f32 %v400, %v998
        %v1014 = vmul.f32 %v401, %v998
        %v1015 = vmul.f32 %v402, %v998
        %v1016 = vsel %vm414, %v1000, 0.0
        %1017 = vadd.xlane.f32.xlu0 %v1016
        %v1018 = vpop.xlane.xlu0 %1017
        %v1019 = vsel %vm414, %v1001, 0.0
        %1020 = vadd.xlane.f32.xlu0 %v1019
        %v1021 = vpop.xlane.xlu0 %1020
        %v1022 = vsel %vm414, %v1002, 0.0
        %1023 = vadd.xlane.f32.xlu0 %v1022
        %v1024 = vpop.xlane.xlu0 %1023
        %v1025 = vsel %vm414, %v1003, 0.0
        %1026 = vadd.xlane.f32.xlu0 %v1025
        %v1027 = vpop.xlane.xlu0 %1026
        %v1028 = vsel %vm414, %v1004, 0.0
        %1029 = vadd.xlane.f32.xlu0 %v1028
        %v1030 = vpop.xlane.xlu0 %1029
        %v1031 = vsel %vm414, %v1005, 0.0
        %1032 = vadd.xlane.f32.xlu0 %v1031
        %v1033 = vpop.xlane.xlu0 %1032
        %v1034 = vsel %vm414, %v1006, 0.0
        %1035 = vadd.xlane.f32.xlu0 %v1034
        %v1036 = vpop.xlane.xlu0 %1035
        %v1037 = vsel %vm414, %v1007, 0.0
        %1038 = vadd.xlane.f32.xlu0 %v1037
        %v1039 = vpop.xlane.xlu0 %1038
        %v1040 = vsel %vm414, %v1008, 0.0
        %1041 = vadd.xlane.f32.xlu0 %v1040
        %v1042 = vpop.xlane.xlu0 %1041
        %v1043 = vsel %vm414, %v1009, 0.0
        %1044 = vadd.xlane.f32.xlu0 %v1043
        %v1045 = vpop.xlane.xlu0 %1044
        %v1046 = vsel %vm414, %v1010, 0.0
        %1047 = vadd.xlane.f32.xlu0 %v1046
        %v1048 = vpop.xlane.xlu0 %1047
        %v1049 = vsel %vm414, %v1011, 0.0
        %1050 = vadd.xlane.f32.xlu0 %v1049
        %v1051 = vpop.xlane.xlu0 %1050
        %v1052 = vsel %vm414, %v1012, 0.0
        %1053 = vadd.xlane.f32.xlu0 %v1052
        %v1054 = vpop.xlane.xlu0 %1053
        %v1055 = vsel %vm414, %v1013, 0.0
        %1056 = vadd.xlane.f32.xlu0 %v1055
        %v1057 = vpop.xlane.xlu0 %1056
        %v1058 = vsel %vm414, %v1014, 0.0
        %1059 = vadd.xlane.f32.xlu0 %v1058
        %v1060 = vpop.xlane.xlu0 %1059
        %v1061 = vsel %vm414, %v1015, 0.0
        %1062 = vadd.xlane.f32.xlu0 %v1061
        %v1063 = vpop.xlane.xlu0 %1062
        %v1064 = vld [vmem:[#allocation2] sm:$0x1]
        %v1066 = vlaneseq
        %v1067 = vshrl.u32 %v1066, 7
        %v1068 = vsub.s32 0, %v1067
        %v1069 = vrot.slane %v1064, %v1068
        %v1071 = vadd.f32 %v1018, %v1069
        %v1072 = vadd.f32 %v1021, %v1069
        %v1073 = vadd.f32 %v1024, %v1069
        %v1074 = vadd.f32 %v1027, %v1069
        %v1075 = vadd.f32 %v1030, %v1069
        %v1076 = vadd.f32 %v1033, %v1069
        %v1077 = vadd.f32 %v1036, %v1069
        %v1078 = vadd.f32 %v1039, %v1069
        %v1079 = vadd.f32 %v1042, %v1069
        %v1080 = vadd.f32 %v1045, %v1069
        %v1081 = vadd.f32 %v1048, %v1069
        %v1082 = vadd.f32 %v1051, %v1069
        %v1083 = vadd.f32 %v1054, %v1069
        %v1084 = vadd.f32 %v1057, %v1069
        %v1085 = vadd.f32 %v1060, %v1069
        %v1086 = vadd.f32 %v1063, %v1069
        %v1087 = vsub.f32 0.0, %v1071
        %v1088 = vsub.f32 0.0, %v1072
        %v1089 = vsub.f32 0.0, %v1073
        %v1090 = vsub.f32 0.0, %v1074
        %v1091 = vsub.f32 0.0, %v1075
        %v1092 = vsub.f32 0.0, %v1076
        %v1093 = vsub.f32 0.0, %v1077
        %v1094 = vsub.f32 0.0, %v1078
        %v1095 = vsub.f32 0.0, %v1079
        %v1096 = vsub.f32 0.0, %v1080
        %v1097 = vsub.f32 0.0, %v1081
        %v1098 = vsub.f32 0.0, %v1082
        %v1099 = vsub.f32 0.0, %v1083
        %v1100 = vsub.f32 0.0, %v1084
        %v1101 = vsub.f32 0.0, %v1085
        %v1102 = vsub.f32 0.0, %v1086
        %v1103 = vmul.f32 %v1087, 1.442695
        %v1104 = vpow.pop %v1103
        %v1105 = vmul.f32 %v1088, 1.442695
        %v1106 = vpow.pop %v1105
        %v1107 = vmul.f32 %v1089, 1.442695
        %v1108 = vpow.pop %v1107
        %v1109 = vmul.f32 %v1090, 1.442695
        %v1110 = vpow.pop %v1109
        %v1111 = vmul.f32 %v1091, 1.442695
        %v1112 = vpow.pop %v1111
        %v1113 = vmul.f32 %v1092, 1.442695
        %v1114 = vpow.pop %v1113
        %v1115 = vmul.f32 %v1093, 1.442695
        %v1116 = vpow.pop %v1115
        %v1117 = vmul.f32 %v1094, 1.442695
        %v1118 = vpow.pop %v1117
        %v1119 = vmul.f32 %v1095, 1.442695
        %v1120 = vpow.pop %v1119
        %v1121 = vmul.f32 %v1096, 1.442695
        %v1122 = vpow.pop %v1121
        %v1123 = vmul.f32 %v1097, 1.442695
        %v1124 = vpow.pop %v1123
        %v1125 = vmul.f32 %v1098, 1.442695
        %v1126 = vpow.pop %v1125
        %v1127 = vmul.f32 %v1099, 1.442695
        %v1128 = vpow.pop %v1127
        %v1129 = vmul.f32 %v1100, 1.442695
        %v1130 = vpow.pop %v1129
        %v1131 = vmul.f32 %v1101, 1.442695
        %v1132 = vpow.pop %v1131
        %v1133 = vmul.f32 %v1102, 1.442695
        %v1134 = vpow.pop %v1133
        %v1135 = vadd.f32 %v1104, 1.0
        %v1136 = vadd.f32 %v1106, 1.0
        %v1137 = vadd.f32 %v1108, 1.0
        %v1138 = vadd.f32 %v1110, 1.0
        %v1139 = vadd.f32 %v1112, 1.0
        %v1140 = vadd.f32 %v1114, 1.0
        %v1141 = vadd.f32 %v1116, 1.0
        %v1142 = vadd.f32 %v1118, 1.0
        %v1143 = vadd.f32 %v1120, 1.0
        %v1144 = vadd.f32 %v1122, 1.0
        %v1145 = vadd.f32 %v1124, 1.0
        %v1146 = vadd.f32 %v1126, 1.0
        %v1147 = vadd.f32 %v1128, 1.0
        %v1148 = vadd.f32 %v1130, 1.0
        %v1149 = vadd.f32 %v1132, 1.0
        %v1150 = vadd.f32 %v1134, 1.0
        %v1151 = vrcp.pop %v1135
        %v1152 = vmul.f32 1.0, %v1151
        %v1153 = vrcp.pop %v1136
        %v1154 = vmul.f32 1.0, %v1153
        %v1155 = vrcp.pop %v1137
        %v1156 = vmul.f32 1.0, %v1155
        %v1157 = vrcp.pop %v1138
        %v1158 = vmul.f32 1.0, %v1157
        %v1159 = vrcp.pop %v1139
        %v1160 = vmul.f32 1.0, %v1159
        %v1161 = vrcp.pop %v1140
        %v1162 = vmul.f32 1.0, %v1161
        %v1163 = vrcp.pop %v1141
        %v1164 = vmul.f32 1.0, %v1163
        %v1165 = vrcp.pop %v1142
        %v1166 = vmul.f32 1.0, %v1165
        %v1167 = vrcp.pop %v1143
        %v1168 = vmul.f32 1.0, %v1167
        %v1169 = vrcp.pop %v1144
        %v1170 = vmul.f32 1.0, %v1169
        %v1171 = vrcp.pop %v1145
        %v1172 = vmul.f32 1.0, %v1171
        %v1173 = vrcp.pop %v1146
        %v1174 = vmul.f32 1.0, %v1173
        %v1175 = vrcp.pop %v1147
        %v1176 = vmul.f32 1.0, %v1175
        %v1177 = vrcp.pop %v1148
        %v1178 = vmul.f32 1.0, %v1177
        %v1179 = vrcp.pop %v1149
        %v1180 = vmul.f32 1.0, %v1179
        %v1181 = vrcp.pop %v1150
        %v1182 = vmul.f32 1.0, %v1181
        %1184 = vset.pattern.permute.xlu0 0
        %1185 = vperm.xlu0 %1184, %v1152
        %v1186 = vpop.permute.xlu0 %1185
        %1189 = vset.pattern.permute.xlu0 0
        %1190 = vperm.xlu0 %1189, %v1154
        %v1191 = vpop.permute.xlu0 %1190
        %1194 = vset.pattern.permute.xlu0 0
        %1195 = vperm.xlu0 %1194, %v1156
        %v1196 = vpop.permute.xlu0 %1195
        %1199 = vset.pattern.permute.xlu0 0
        %1200 = vperm.xlu0 %1199, %v1158
        %v1201 = vpop.permute.xlu0 %1200
        %1204 = vset.pattern.permute.xlu0 0
        %1205 = vperm.xlu0 %1204, %v1160
        %v1206 = vpop.permute.xlu0 %1205
        %1209 = vset.pattern.permute.xlu0 0
        %1210 = vperm.xlu0 %1209, %v1162
        %v1211 = vpop.permute.xlu0 %1210
        %1214 = vset.pattern.permute.xlu0 0
        %1215 = vperm.xlu0 %1214, %v1164
        %v1216 = vpop.permute.xlu0 %1215
        %1219 = vset.pattern.permute.xlu0 0
        %1220 = vperm.xlu0 %1219, %v1166
        %v1221 = vpop.permute.xlu0 %1220
        %1224 = vset.pattern.permute.xlu0 0
        %1225 = vperm.xlu0 %1224, %v1168
        %v1226 = vpop.permute.xlu0 %1225
        %1229 = vset.pattern.permute.xlu0 0
        %1230 = vperm.xlu0 %1229, %v1170
        %v1231 = vpop.permute.xlu0 %1230
        %1234 = vset.pattern.permute.xlu0 0
        %1235 = vperm.xlu0 %1234, %v1172
        %v1236 = vpop.permute.xlu0 %1235
        %1239 = vset.pattern.permute.xlu0 0
        %1240 = vperm.xlu0 %1239, %v1174
        %v1241 = vpop.permute.xlu0 %1240
        %1244 = vset.pattern.permute.xlu0 0
        %1245 = vperm.xlu0 %1244, %v1176
        %v1246 = vpop.permute.xlu0 %1245
        %1249 = vset.pattern.permute.xlu0 0
        %1250 = vperm.xlu0 %1249, %v1178
        %v1251 = vpop.permute.xlu0 %1250
        %1254 = vset.pattern.permute.xlu0 0
        %1255 = vperm.xlu0 %1254, %v1180
        %v1256 = vpop.permute.xlu0 %1255
        %1259 = vset.pattern.permute.xlu0 0
        %1260 = vperm.xlu0 %1259, %v1182
        %v1261 = vpop.permute.xlu0 %1260
        %v1263 = vmul.f32 %v977, %v1186
        %v1264 = vmul.f32 %v978, %v1191
        %v1265 = vmul.f32 %v979, %v1196
        %v1266 = vmul.f32 %v980, %v1201
        %v1267 = vmul.f32 %v981, %v1206
        %v1268 = vmul.f32 %v982, %v1211
        %v1269 = vmul.f32 %v983, %v1216
        %v1270 = vmul.f32 %v984, %v1221
        %v1271 = vmul.f32 %v985, %v1226
        %v1272 = vmul.f32 %v986, %v1231
        %v1273 = vmul.f32 %v987, %v1236
        %v1274 = vmul.f32 %v988, %v1241
        %v1275 = vmul.f32 %v989, %v1246
        %v1276 = vmul.f32 %v990, %v1251
        %v1277 = vmul.f32 %v991, %v1256
        %v1278 = vmul.f32 %v992, %v1261
        %v1279 = vld [vmem:[%s378] sm:$0xff]
        %v1280 = vld [vmem:[%s378 + $0x8] sm:$0xff]
        %v1281 = vld [vmem:[%s378 + $0x10] sm:$0xff]
        %v1282 = vld [vmem:[%s378 + $0x18] sm:$0xff]
        %v1283 = vld [vmem:[%s378 + $0x20] sm:$0xff]
        %v1284 = vld [vmem:[%s378 + $0x28] sm:$0xff]
        %v1285 = vld [vmem:[%s378 + $0x30] sm:$0xff]
        %v1286 = vld [vmem:[%s378 + $0x38] sm:$0xff]
        %v1287 = vld [vmem:[%s378 + $0x40] sm:$0xff]
        %v1288 = vld [vmem:[%s378 + $0x48] sm:$0xff]
        %v1289 = vld [vmem:[%s378 + $0x50] sm:$0xff]
        %v1290 = vld [vmem:[%s378 + $0x58] sm:$0xff]
        %v1291 = vld [vmem:[%s378 + $0x60] sm:$0xff]
        %v1292 = vld [vmem:[%s378 + $0x68] sm:$0xff]
        %v1293 = vld [vmem:[%s378 + $0x70] sm:$0xff]
        %v1294 = vld [vmem:[%s378 + $0x78] sm:$0xff]
        %v1295 = vsub.f32 1.0, %v1152
        %v1296 = vsub.f32 1.0, %v1154
        %v1297 = vsub.f32 1.0, %v1156
        %v1298 = vsub.f32 1.0, %v1158
        %v1299 = vsub.f32 1.0, %v1160
        %v1300 = vsub.f32 1.0, %v1162
        %v1301 = vsub.f32 1.0, %v1164
        %v1302 = vsub.f32 1.0, %v1166
        %v1303 = vsub.f32 1.0, %v1168
        %v1304 = vsub.f32 1.0, %v1170
        %v1305 = vsub.f32 1.0, %v1172
        %v1306 = vsub.f32 1.0, %v1174
        %v1307 = vsub.f32 1.0, %v1176
        %v1308 = vsub.f32 1.0, %v1178
        %v1309 = vsub.f32 1.0, %v1180
        %v1310 = vsub.f32 1.0, %v1182
        %1312 = vset.pattern.permute.xlu0 0
        %1313 = vperm.xlu0 %1312, %v1295
        %v1314 = vpop.permute.xlu0 %1313
        %1317 = vset.pattern.permute.xlu0 0
        %1318 = vperm.xlu0 %1317, %v1296
        %v1319 = vpop.permute.xlu0 %1318
        %1322 = vset.pattern.permute.xlu0 0
        %1323 = vperm.xlu0 %1322, %v1297
        %v1324 = vpop.permute.xlu0 %1323
        %1327 = vset.pattern.permute.xlu0 0
        %1328 = vperm.xlu0 %1327, %v1298
        %v1329 = vpop.permute.xlu0 %1328
        %1332 = vset.pattern.permute.xlu0 0
        %1333 = vperm.xlu0 %1332, %v1299
        %v1334 = vpop.permute.xlu0 %1333
        %1337 = vset.pattern.permute.xlu0 0
        %1338 = vperm.xlu0 %1337, %v1300
        %v1339 = vpop.permute.xlu0 %1338
        %1342 = vset.pattern.permute.xlu0 0
        %1343 = vperm.xlu0 %1342, %v1301
        %v1344 = vpop.permute.xlu0 %1343
        %1347 = vset.pattern.permute.xlu0 0
        %1348 = vperm.xlu0 %1347, %v1302
        %v1349 = vpop.permute.xlu0 %1348
        %1352 = vset.pattern.permute.xlu0 0
        %1353 = vperm.xlu0 %1352, %v1303
        %v1354 = vpop.permute.xlu0 %1353
        %1357 = vset.pattern.permute.xlu0 0
        %1358 = vperm.xlu0 %1357, %v1304
        %v1359 = vpop.permute.xlu0 %1358
        %1362 = vset.pattern.permute.xlu0 0
        %1363 = vperm.xlu0 %1362, %v1305
        %v1364 = vpop.permute.xlu0 %1363
        %1367 = vset.pattern.permute.xlu0 0
        %1368 = vperm.xlu0 %1367, %v1306
        %v1369 = vpop.permute.xlu0 %1368
        %1372 = vset.pattern.permute.xlu0 0
        %1373 = vperm.xlu0 %1372, %v1307
        %v1374 = vpop.permute.xlu0 %1373
        %1377 = vset.pattern.permute.xlu0 0
        %1378 = vperm.xlu0 %1377, %v1308
        %v1379 = vpop.permute.xlu0 %1378
        %1382 = vset.pattern.permute.xlu0 0
        %1383 = vperm.xlu0 %1382, %v1309
        %v1384 = vpop.permute.xlu0 %1383
        %1387 = vset.pattern.permute.xlu0 0
        %1388 = vperm.xlu0 %1387, %v1310
        %v1389 = vpop.permute.xlu0 %1388
        %v1391 = vmul.f32 %v1279, %v1314
        %v1392 = vmul.f32 %v1280, %v1319
        %v1393 = vmul.f32 %v1281, %v1324
        %v1394 = vmul.f32 %v1282, %v1329
        %v1395 = vmul.f32 %v1283, %v1334
        %v1396 = vmul.f32 %v1284, %v1339
        %v1397 = vmul.f32 %v1285, %v1344
        %v1398 = vmul.f32 %v1286, %v1349
        %v1399 = vmul.f32 %v1287, %v1354
        %v1400 = vmul.f32 %v1288, %v1359
        %v1401 = vmul.f32 %v1289, %v1364
        %v1402 = vmul.f32 %v1290, %v1369
        %v1403 = vmul.f32 %v1291, %v1374
        %v1404 = vmul.f32 %v1292, %v1379
        %v1405 = vmul.f32 %v1293, %v1384
        %v1406 = vmul.f32 %v1294, %v1389
        %v1407 = vadd.f32 %v1263, %v1391
        %v1408 = vadd.f32 %v1264, %v1392
        %v1409 = vadd.f32 %v1265, %v1393
        %v1410 = vadd.f32 %v1266, %v1394
        %v1411 = vadd.f32 %v1267, %v1395
        %v1412 = vadd.f32 %v1268, %v1396
        %v1413 = vadd.f32 %v1269, %v1397
        %v1414 = vadd.f32 %v1270, %v1398
        %v1415 = vadd.f32 %v1271, %v1399
        %v1416 = vadd.f32 %v1272, %v1400
        %v1417 = vadd.f32 %v1273, %v1401
        %v1418 = vadd.f32 %v1274, %v1402
        %v1419 = vadd.f32 %v1275, %v1403
        %v1420 = vadd.f32 %v1276, %v1404
        %v1421 = vadd.f32 %v1277, %v1405
        %v1422 = vadd.f32 %v1278, %v1406
        %1423 = vst [vmem:[%s360] sm:$0xff] %v1407
        %1424 = vst [vmem:[%s360 + $0x8] sm:$0xff] %v1408
        %1425 = vst [vmem:[%s360 + $0x10] sm:$0xff] %v1409
        %1426 = vst [vmem:[%s360 + $0x18] sm:$0xff] %v1410
        %1427 = vst [vmem:[%s360 + $0x20] sm:$0xff] %v1411
        %1428 = vst [vmem:[%s360 + $0x28] sm:$0xff] %v1412
        %1429 = vst [vmem:[%s360 + $0x30] sm:$0xff] %v1413
        %1430 = vst [vmem:[%s360 + $0x38] sm:$0xff] %v1414
        %1431 = vst [vmem:[%s360 + $0x40] sm:$0xff] %v1415
        %1432 = vst [vmem:[%s360 + $0x48] sm:$0xff] %v1416
        %1433 = vst [vmem:[%s360 + $0x50] sm:$0xff] %v1417
        %1434 = vst [vmem:[%s360 + $0x58] sm:$0xff] %v1418
        %1435 = vst [vmem:[%s360 + $0x60] sm:$0xff] %v1419
        %1436 = vst [vmem:[%s360 + $0x68] sm:$0xff] %v1420
        %1437 = vst [vmem:[%s360 + $0x70] sm:$0xff] %v1421
        %1438 = vst [vmem:[%s360 + $0x78] sm:$0xff] %v1422
        %vm1439 = vcmask 7168
        %1440 = vst.msk [vmem:[%s385] sm:$0xff] %vm1439, %v1152
        %1441 = vst.msk [vmem:[%s385 + $0x8] sm:$0xff] %vm1439, %v1154
        %1442 = vst.msk [vmem:[%s385 + $0x10] sm:$0xff] %vm1439, %v1156
        %1443 = vst.msk [vmem:[%s385 + $0x18] sm:$0xff] %vm1439, %v1158
        %1444 = vst.msk [vmem:[%s385 + $0x20] sm:$0xff] %vm1439, %v1160
        %1445 = vst.msk [vmem:[%s385 + $0x28] sm:$0xff] %vm1439, %v1162
        %1446 = vst.msk [vmem:[%s385 + $0x30] sm:$0xff] %vm1439, %v1164
        %1447 = vst.msk [vmem:[%s385 + $0x38] sm:$0xff] %vm1439, %v1166
        %1448 = vst.msk [vmem:[%s385 + $0x40] sm:$0xff] %vm1439, %v1168
        %1449 = vst.msk [vmem:[%s385 + $0x48] sm:$0xff] %vm1439, %v1170
        %1450 = vst.msk [vmem:[%s385 + $0x50] sm:$0xff] %vm1439, %v1172
        %1451 = vst.msk [vmem:[%s385 + $0x58] sm:$0xff] %vm1439, %v1174
        %1452 = vst.msk [vmem:[%s385 + $0x60] sm:$0xff] %vm1439, %v1176
        %1453 = vst.msk [vmem:[%s385 + $0x68] sm:$0xff] %vm1439, %v1178
        %1454 = vst.msk [vmem:[%s385 + $0x70] sm:$0xff] %vm1439, %v1180
        %1455 = vst.msk [vmem:[%s385 + $0x78] sm:$0xff] %vm1439, %v1182
        %s1456 = sand.u32 %s213, 1
        %s1457 = scalar_lea.sflag [#allocation5], %s1456
        %s1458 = sand.u32 %s213, 1
        %s1459 = smul.addr %s1458, 128
        %s1460 = scalar_lea.vmem [#allocation6], %s1459
        %s1461 = smul.u32 16, %s27
        %p1462 = scmp.lt.s32.totalorder %s1461, 31
        %s1463 = scalar_select %p1462, %s1461, 31
        %s1464 = smul.addr %s1463, 8
        %s1465 = scalar_lea.vmem %s9, %s1464
        // Predicated region
        $region57: #{tpu_custom_call.1} parent=51 // pred_check
          %p1466 = pneg %p223
        $region58: #{tpu_custom_call.1} parent=51 // pred_check_branch
          %1468 = sbr.rel (%p1466) target = $region60
        $region59: #{tpu_custom_call.1} parent=51 // pred_region
          %s1469 = smul.u32 16, %s27
          %s1471 = ssub.s32 2048, 2048
          %1472 = vsyncadd %s1457, %s1471
          %s1473 = smul.addr %s1469, 128
          %s1474 = scalar_lea.hbm %s8, %s1473
          %s1475 = sshll.u32 %s1460, 4
          %s1476 = int_to_ptr.vmem [resolvable:$true] %s1475
          %1481 = dma.vmem_to_hbm [thread:$0]  %s1476, 2048, %s1474, %s1457, 128, 128, 8
        $region60: #{tpu_custom_call.1} parent=51 // pred_fallthru
          _
        // Predicated region
        $region61: #{tpu_custom_call.1} parent=51 // pred_check
          %p1482 = pneg %p249
        $region62: #{tpu_custom_call.1} parent=51 // pred_check_branch
          %1484 = sbr.rel (%p1482) target = $region64
        $region63: #{tpu_custom_call.1} parent=51 // pred_region
          %s1485 = smul.u32 16, %s27
        $region64: #{tpu_custom_call.1} parent=51 // pred_fallthru
          _
      $region52: #{tpu_custom_call.1} parent=5 // pred_fallthru
        _
      %p1486 = scmp.le.s32.totalorder 2, %s22
      // Predicated region
      $region65: #{tpu_custom_call.1} parent=5 // pred_check
        %p1487 = pneg %p1486
      $region66: #{tpu_custom_call.1} parent=5 // pred_check_branch
        %1489 = sbr.rel (%p1487) target = $region68
      $region67: #{tpu_custom_call.1} parent=5 // pred_region
        %s1490 = ssub.s32 %s22, 2
        // Predicated region
        $region69: #{tpu_custom_call.1} parent=67 // pred_check
          %p1491 = pneg %p229
        $region70: #{tpu_custom_call.1} parent=67 // pred_check_branch
          %1493 = sbr.rel (%p1491) target = $region72
        $region71: #{tpu_custom_call.1} parent=67 // pred_region
          %s1494 = sand.u32 %s214, 1
          %s1495 = scalar_lea.sflag [#allocation5], %s1494
          %s1496 = sand.u32 %s214, 1
          %s1497 = smul.addr %s1496, 128
          %s1498 = scalar_lea.vmem [#allocation6], %s1497
          %1499 = dma.done %s1495, 2048
        $region72: #{tpu_custom_call.1} parent=67 // pred_fallthru
          _
        // Predicated region
        $region73: #{tpu_custom_call.1} parent=67 // pred_check
          %p1500 = pneg %p255
        $region74: #{tpu_custom_call.1} parent=67 // pred_check_branch
          %1502 = sbr.rel (%p1500) target = $region76
        $region75: #{tpu_custom_call.1} parent=67 // pred_region
          %s1503 = smul.u32 16, %s28
          %p1504 = scmp.lt.s32.totalorder %s1503, 31
          %s1505 = scalar_select %p1504, %s1503, 31
          %s1506 = smul.addr %s1505, 8
          %s1507 = scalar_lea.vmem %s9, %s1506
        $region76: #{tpu_custom_call.1} parent=67 // pred_fallthru
          _
      $region68: #{tpu_custom_call.1} parent=5 // pred_fallthru
        _
    $region6: #{tpu_custom_call.1} parent=1 // loop_footer
      %s26 = sadd.s32 1, %s22
    $region7: #{tpu_custom_call.1} parent=1 // loop_footer_branch
      %21 = sbr.rel target = $region3
    $region8: #{tpu_custom_call.1} parent=1 // loop_exit
      _
    %1508 = vsyncpa [#allocation4], 1
    %s1509 = scalar_lea.sflag [#allocation4], 1
    %1510 = vsyncpa %s1509, 1
    %1511 = vsyncpa [#allocation5], 1
    %s1512 = scalar_lea.sflag [#allocation5], 1
    %1513 = vsyncpa %s1512, 1

</llo_original>
